<compile_context>
chip_gen: v7x
topology: tpu7x:2x2x1
jax: 0.10.0
libtpu: 0.0.40
codegen_flags: <defaults>
</compile_context>

<pallas_src>
import functools

import jax
import jax.numpy as jnp
from jax.experimental import pallas as pl
from jax.experimental.pallas import tpu as pltpu

K = 4            # conv kernel size
STRIDE = 2
PAD = 2          # 'same' padding for K=4 -> K // 2
BN_EPS = 1e-5
LRELU_SLOPE = 0.2


# ----------------------------------------------------------------------------
# Fused kernel: [Conv->BN->LReLU] x 2, everything resident in VMEM.
# ----------------------------------------------------------------------------
def _fused_cnn_kernel(cols1_ref, w1_ref, b1_ref, g1_ref, bt1_ref, m1_ref,
                      w2_ref, b2_ref, g2_ref, bt2_ref, m2_ref,
                      conv1_ref, conv2_ref, act2_ref,
                      *, n_batch, hg, wg, ho2, n_valid1, n_valid2):
    # cols1_ref : (M1, K*K*Cin)  bf16  im2col of block-1 input over the extended output grid,
    #                                  rows ordered (a, b, i, n, j)  with (u,v)=(2i+a, 2j+b)
    # w1_ref    : (K*K*Cin, C1)  bf16  w1[kh*K*Cin + kw*Cin + ci, co] = W1[co, ci, kh, kw]
    # m1_ref    : (M1, 1)        f32   1.0 on real conv-1 output positions, 0.0 on the pad ring
    # w2_ref    : (K*K*C1, C2)   bf16  same (kh, kw, ci) ordering
    # m2_ref    : (M2, 1)        f32   1.0 on real conv-2 output columns (j < Wo2)
    # conv1_ref : (M1, C1)  f32  raw conv-1 output (discr layer 1, incl. grid-pad garbage rows)
    # conv2_ref : (M2, C2)  f32  raw conv-2 output (discr layer 2, incl. garbage columns)
    # act2_ref  : (M2, C2)  f32  BN + LeakyReLU of conv-2 (the module's `out`)

    # ---------------- block 1: Conv2d(Cin->C1, k=4, s=2, p=2) ----------------
    # One im2col matmul on the MXU (contraction depth K*K*Cin), f32 accumulation.
    conv1 = jnp.dot(cols1_ref[...], w1_ref[...],
                    preferred_element_type=jnp.float32) + b1_ref[...]
    conv1_ref[...] = conv1                              # single store

    # BatchNorm2d (training mode): biased batch stats over the n_valid1 true positions only.
    msk1 = m1_ref[...]
    inv_n1 = 1.0 / n_valid1                             # compile-time constant
    mean1 = jnp.sum(conv1 * msk1, axis=0, keepdims=True) * inv_n1
    d1 = conv1 - mean1
    var1 = jnp.sum(d1 * d1 * msk1, axis=0, keepdims=True) * inv_n1
    y1 = d1 * (jax.lax.rsqrt(var1 + BN_EPS) * g1_ref[...]) + bt1_ref[...]
    # LeakyReLU(0.2); the mask zeroes the ring, so act1 == block-2's zero-padded input grid.
    act1 = jnp.where(y1 > 0, y1, LRELU_SLOPE * y1) * msk1     # (M1, C1) f32

    # ---------------- block 2: Conv2d(C1->C2, k=4, s=2, p=2) -----------------
    # Row ordering (a, b, i, n, j) makes every tap (kh, kw) a single contiguous row-slice of
    # act1 (the stride-2 / phase arithmetic folds into a static offset).  The two extra grid
    # columns (j >= Wo2) absorb the kw-offset leak and are discarded by mask2 / the wrapper.
    m2_rows = ho2 * n_batch * wg
    taps = []
    for kh in range(K):
        for kw in range(K):
            a, hh = kh % 2, kh // 2
            b, ww = kw % 2, kw // 2
            off = ((a * 2 + b) * hg + hh) * (n_batch * wg) + ww
            taps.append(act1[off:off + m2_rows, :])
    cols2 = jnp.concatenate(taps, axis=1).astype(jnp.bfloat16)    # (M2, K*K*C1)
    conv2 = jnp.dot(cols2, w2_ref[...],
                    preferred_element_type=jnp.float32) + b2_ref[...]
    conv2_ref[...] = conv2                              # single store

    msk2 = m2_ref[...]
    inv_n2 = 1.0 / n_valid2
    mean2 = jnp.sum(conv2 * msk2, axis=0, keepdims=True) * inv_n2
    d2 = conv2 - mean2
    var2 = jnp.sum(d2 * d2 * msk2, axis=0, keepdims=True) * inv_n2
    y2 = d2 * (jax.lax.rsqrt(var2 + BN_EPS) * g2_ref[...]) + bt2_ref[...]
    act2_ref[...] = jnp.where(y2 > 0, y2, LRELU_SLOPE * y2)


def _even(v):
    return v + (v % 2)


def _fused_cnn_forward(x_nhwc, p1, p2):
    """Runs both conv-bn-lrelu blocks in one pallas_call.  Returns NCHW tensors."""
    nb, h, w, cin = x_nhwc.shape
    c1 = p1["w_mat"].shape[1]
    c2 = p2["w_mat"].shape[1]
    ho1 = (h + 2 * PAD - K) // STRIDE + 1
    wo1 = (w + 2 * PAD - K) // STRIDE + 1
    ho2 = (ho1 + 2 * PAD - K) // STRIDE + 1
    wo2 = (wo1 + 2 * PAD - K) // STRIDE + 1

    # Block-1 "extended" output grid == block-2's zero-padded input grid, even extents.
    gh, gw = _even(ho1 + 2 * PAD), _even(wo1 + 2 * PAD)
    hg, wg = gh // 2, gw // 2
    m1 = 4 * hg * nb * wg                 # block-1 rows, ordered (a, b, i, n, j)
    m2 = ho2 * nb * wg                    # block-2 rows, ordered (i_out, n, j), j in [0, wg)
    # Bounds required by the contiguous-slice trick inside the kernel.
    assert hg >= ho2 + 2 and wg >= wo2 + 1, (hg, wg, ho2, wo2)

    # ---- im2col of the (zero-padded) input over the extended grid, built once in XLA ----
    pb = PAD * (STRIDE + 1)                                       # = 6
    xe = jnp.pad(x_nhwc, ((0, 0),
                          (pb, 2 * gh + K - 2 - h - pb),
                          (pb, 2 * gw + K - 2 - w - pb),
                          (0, 0)))                                # (N, 2*gh+2, 2*gw+2, Cin)
    taps = [xe[:, kh:kh + 2 * gh:2, kw:kw + 2 * gw:2, :]
            for kh in range(K) for kw in range(K)]                # each (N, gh, gw, Cin)
    cols = jnp.stack(taps, axis=3).reshape(nb, gh, gw, K * K * cin)
    cols = cols.reshape(nb, hg, 2, wg, 2, K * K * cin)            # (n, i, a, j, b, cols)
    cols1 = jnp.transpose(cols, (2, 4, 1, 0, 3, 5)).reshape(m1, K * K * cin)
    cols1 = cols1.astype(jnp.bfloat16)

    # ---- validity masks (real conv outputs vs grid padding), same row orderings ----
    vu = (jnp.arange(gh) >= PAD) & (jnp.arange(gh) < PAD + ho1)
    vv = (jnp.arange(gw) >= PAD) & (jnp.arange(gw) < PAD + wo1)
    msk = (vu[:, None] & vv[None, :]).astype(jnp.float32)
    msk = jnp.broadcast_to(msk[None], (nb, gh, gw)).reshape(nb, hg, 2, wg, 2)
    mask1 = jnp.transpose(msk, (2, 4, 1, 0, 3)).reshape(m1, 1)
    mask2 = jnp.broadcast_to((jnp.arange(wg) < wo2).astype(jnp.float32)[None, None, :],
                             (ho2, nb, wg)).reshape(m2, 1)

    kernel = functools.partial(
        _fused_cnn_kernel, n_batch=nb, hg=hg, wg=wg, ho2=ho2,
        n_valid1=float(nb * ho1 * wo1), n_valid2=float(nb * ho2 * wo2))

    conv1_f, conv2_f, act2_f = pl.pallas_call(
        kernel,
        out_shape=(jax.ShapeDtypeStruct((m1, c1), jnp.float32),
                   jax.ShapeDtypeStruct((m2, c2), jnp.float32),
                   jax.ShapeDtypeStruct((m2, c2), jnp.float32)),
        grid=(1,),
        in_specs=[
            pl.BlockSpec((m1, K * K * cin), lambda i: (0, 0)),
            pl.BlockSpec((K * K * cin, c1), lambda i: (0, 0)),
            pl.BlockSpec((1, c1), lambda i: (0, 0)),
            pl.BlockSpec((1, c1), lambda i: (0, 0)),
            pl.BlockSpec((1, c1), lambda i: (0, 0)),
            pl.BlockSpec((m1, 1), lambda i: (0, 0)),
            pl.BlockSpec((K * K * c1, c2), lambda i: (0, 0)),
            pl.BlockSpec((1, c2), lambda i: (0, 0)),
            pl.BlockSpec((1, c2), lambda i: (0, 0)),
            pl.BlockSpec((1, c2), lambda i: (0, 0)),
            pl.BlockSpec((m2, 1), lambda i: (0, 0)),
        ],
        out_specs=(
            pl.BlockSpec((m1, c1), lambda i: (0, 0)),
            pl.BlockSpec((m2, c2), lambda i: (0, 0)),
            pl.BlockSpec((m2, c2), lambda i: (0, 0)),
        ),
        compiler_params=pltpu.CompilerParams(dimension_semantics=("arbitrary",)),
    )(cols1, p1["w_mat"], p1["b"], p1["gamma"], p1["beta"], mask1,
      p2["w_mat"], p2["b"], p2["gamma"], p2["beta"], mask2)

    # ---- un-flatten to the module's NCHW convention (tiny, one-time XLA layout ops) ----
    t = conv1_f.reshape(2, 2, hg, nb, wg, c1)
    t = jnp.transpose(t, (3, 2, 0, 4, 1, 5)).reshape(nb, gh, gw, c1)
    discr1 = jnp.transpose(t[:, PAD:PAD + ho1, PAD:PAD + wo1, :], (0, 3, 1, 2))

    t2 = conv2_f.reshape(ho2, nb, wg, c2)[:, :, :wo2, :]
    discr2 = jnp.transpose(t2, (1, 3, 0, 2))
    a2 = act2_f.reshape(ho2, nb, wg, c2)[:, :, :wo2, :]
    out = jnp.transpose(a2, (1, 3, 0, 2))
    return out, discr1, discr2


# ----------------------------------------------------------------------------
# Parameters (deterministic, PyTorch-like init shapes)
# ----------------------------------------------------------------------------
def init_params(key, in_dim, channels):
    blocks = []
    for cout in channels:
        key, k1, k2, k3, k4 = jax.random.split(key, 5)
        bound = 1.0 / float((in_dim * K * K) ** 0.5)
        w_oihw = jax.random.uniform(k1, (cout, in_dim, K, K), jnp.float32, -bound, bound)
        b = jax.random.uniform(k2, (cout,), jnp.float32, -bound, bound)
        gamma = 1.0 + 0.1 * jax.random.normal(k3, (cout,), jnp.float32)
        beta = 0.1 * jax.random.normal(k4, (cout,), jnp.float32)
        # (kh, kw, ci) x co matrix for the im2col matmuls, bf16 for the MXU fast path.
        w_mat = (jnp.transpose(w_oihw, (2, 3, 1, 0))
                 .reshape(K * K * in_dim, cout)
                 .astype(jnp.bfloat16))
        blocks.append(dict(
            w_oihw=w_oihw,                                   # PyTorch layout (for reference)
            w_mat=w_mat,
            b=b.reshape(1, cout), gamma=gamma.reshape(1, cout), beta=beta.reshape(1, cout)))
        in_dim = cout
    # classifier Conv2d(out_dim, 1, 1): created by __init__ but unused in forward()
    key, k1, k2 = jax.random.split(key, 3)
    bound = 1.0 / float(in_dim ** 0.5)
    clf_w = jax.random.uniform(k1, (1, in_dim, 1, 1), jnp.float32, -bound, bound)
    clf_b = jax.random.uniform(k2, (1,), jnp.float32, -bound, bound)
    return dict(blocks=blocks, classifier=dict(w=clf_w, b=clf_b))


# ----------------------------------------------------------------------------
# PatchDiscriminator.forward
# ----------------------------------------------------------------------------
def patch_discriminator_forward(x, layout, params):
    """x, layout: NCHW float32.  Returns (out_NCHW, [discr_layer_NCHW, ...])."""
    if layout is not None:
        x = jnp.concatenate([x, layout], axis=1)          # torch.cat([x, layout], dim=1)
    x_nhwc = jnp.transpose(x, (0, 2, 3, 1))               # NCHW -> NHWC (channels on lanes)
    p1, p2 = params["blocks"]                             # specialized to the 2-block arch
    out, discr1, discr2 = _fused_cnn_forward(x_nhwc, p1, p2)
    # params["classifier"] exists but (like the PyTorch module) is never applied in forward().
    return out, [discr1, discr2]


# ----------------------------------------------------------------------------
# Pure-JAX reference (for correctness check only)
# ----------------------------------------------------------------------------
def reference_forward(x, layout, params):
    if layout is not None:
        x = jnp.concatenate([x, layout], axis=1)
    h = x
    layers = []
    for p in params["blocks"]:
        c = jax.lax.conv_general_dilated(
            h, p["w_oihw"], window_strides=(STRIDE, STRIDE),
            padding=((PAD, PAD), (PAD, PAD)),
            dimension_numbers=('NCHW', 'OIHW', 'NCHW'))
        c = c + p["b"].reshape(1, -1, 1, 1)
        layers.append(c)
        mean = jnp.mean(c, axis=(0, 2, 3), keepdims=True)
        var = jnp.mean(jnp.square(c - mean), axis=(0, 2, 3), keepdims=True)
        y = (c - mean) * jax.lax.rsqrt(var + BN_EPS)
        y = y * p["gamma"].reshape(1, -1, 1, 1) + p["beta"].reshape(1, -1, 1, 1)
        h = jnp.where(y > 0, y, LRELU_SLOPE * y)
    return h, layers


if __name__ == "__main__":
    key = jax.random.PRNGKey(0)
    kx, kl, kp = jax.random.split(key, 3)
    x = jax.random.normal(kx, (2, 3, 16, 16), jnp.float32)        # image, NCHW
    layout = jax.random.normal(kl, (2, 1, 16, 16), jnp.float32)   # layout_dim = 1
    params = init_params(kp, in_dim=4, channels=(8, 16))          # arch 'C4-8-2,C4-16-2'

    fwd = jax.jit(patch_discriminator_forward)
    out, discr_layers = fwd(x, layout, params)
    out = jax.block_until_ready(out)
    discr_layers = [jax.block_until_ready(d) for d in discr_layers]

    assert out.shape == (2, 16, 5, 5), out.shape
    assert discr_layers[0].shape == (2, 8, 9, 9), discr_layers[0].shape
    assert discr_layers[1].shape == (2, 16, 5, 5), discr_layers[1].shape

    ref_out, ref_layers = reference_forward(x, layout, params)
    ok = bool(jnp.allclose(out, ref_out, rtol=3e-2, atol=3e-2))
    for a, b in zip(discr_layers, ref_layers):
        ok &= bool(jnp.allclose(a, b, rtol=3e-2, atol=3e-2))
    if not ok:
        raise RuntimeError("Pallas output does not match JAX reference")
    print("KERNEL_OK")
</pallas_src>

<mosaic_0001>
module attributes {stable_mosaic.version = 11 : i64} {
  func.func @_fused_cnn_kernel(%arg0: i32, %arg1: memref<392x64xbf16, #tpu.memory_space<vmem>>, %arg2: memref<64x8xbf16, #tpu.memory_space<vmem>>, %arg3: memref<1x8xf32, #tpu.memory_space<vmem>>, %arg4: memref<1x8xf32, #tpu.memory_space<vmem>>, %arg5: memref<1x8xf32, #tpu.memory_space<vmem>>, %arg6: memref<392x1xf32, #tpu.memory_space<vmem>>, %arg7: memref<128x16xbf16, #tpu.memory_space<vmem>>, %arg8: memref<1x16xf32, #tpu.memory_space<vmem>>, %arg9: memref<1x16xf32, #tpu.memory_space<vmem>>, %arg10: memref<1x16xf32, #tpu.memory_space<vmem>>, %arg11: memref<70x1xf32, #tpu.memory_space<vmem>>, %arg12: memref<392x8xf32, #tpu.memory_space<vmem>>, %arg13: memref<70x16xf32, #tpu.memory_space<vmem>>, %arg14: memref<70x16xf32, #tpu.memory_space<vmem>>) attributes {dimension_semantics = [#tpu.dimension_semantics<arbitrary>], iteration_bounds = array<i64: 1>, scalar_prefetch = 0 : i64, scratch_operands = 0 : i64, tpu.core_type = #tpu.core_type<tc>, window_params = [{pipeline_mode = #tpu.pipeline_mode<synchronous>, transform_indices = @transform_0, window_bounds = array<i64: 392, 64>}, {pipeline_mode = #tpu.pipeline_mode<synchronous>, transform_indices = @transform_1, window_bounds = array<i64: 64, 8>}, {pipeline_mode = #tpu.pipeline_mode<synchronous>, transform_indices = @transform_2, window_bounds = array<i64: 1, 8>}, {pipeline_mode = #tpu.pipeline_mode<synchronous>, transform_indices = @transform_3, window_bounds = array<i64: 1, 8>}, {pipeline_mode = #tpu.pipeline_mode<synchronous>, transform_indices = @transform_4, window_bounds = array<i64: 1, 8>}, {pipeline_mode = #tpu.pipeline_mode<synchronous>, transform_indices = @transform_5, window_bounds = array<i64: 392, 1>}, {pipeline_mode = #tpu.pipeline_mode<synchronous>, transform_indices = @transform_6, window_bounds = array<i64: 128, 16>}, {pipeline_mode = #tpu.pipeline_mode<synchronous>, transform_indices = @transform_7, window_bounds = array<i64: 1, 16>}, {pipeline_mode = #tpu.pipeline_mode<synchronous>, transform_indices = @transform_8, window_bounds = array<i64: 1, 16>}, {pipeline_mode = #tpu.pipeline_mode<synchronous>, transform_indices = @transform_9, window_bounds = array<i64: 1, 16>}, {pipeline_mode = #tpu.pipeline_mode<synchronous>, transform_indices = @transform_10, window_bounds = array<i64: 70, 1>}, {pipeline_mode = #tpu.pipeline_mode<synchronous>, transform_indices = @transform_11, window_bounds = array<i64: 392, 8>}, {pipeline_mode = #tpu.pipeline_mode<synchronous>, transform_indices = @transform_12, window_bounds = array<i64: 70, 16>}, {pipeline_mode = #tpu.pipeline_mode<synchronous>, transform_indices = @transform_13, window_bounds = array<i64: 70, 16>}]} {
    %c0 = arith.constant 0 : index
    %c0_0 = arith.constant 0 : index
    %0 = vector.load %arg1[%c0, %c0_0] : memref<392x64xbf16, #tpu.memory_space<vmem>>, vector<392x64xbf16>
    %c0_1 = arith.constant 0 : index
    %c0_2 = arith.constant 0 : index
    %1 = vector.load %arg2[%c0_1, %c0_2] : memref<64x8xbf16, #tpu.memory_space<vmem>>, vector<64x8xbf16>
    %cst = arith.constant dense<0.000000e+00> : vector<392x8xf32>
    %2 = tpu.matmul %0, %1, %cst {dimension_numbers = #tpu.dot_dimension_numbers<[1], [0], [0], [1], [0, 0, 1, 1], [], []>} : vector<392x64xbf16>, vector<64x8xbf16>, vector<392x8xf32> -> vector<392x8xf32>
    %c0_3 = arith.constant 0 : index
    %c0_4 = arith.constant 0 : index
    %3 = vector.load %arg3[%c0_3, %c0_4] : memref<1x8xf32, #tpu.memory_space<vmem>>, vector<1x8xf32>
    %4 = vector.broadcast %3 : vector<1x8xf32> to vector<392x8xf32>
    %5 = arith.addf %2, %4 : vector<392x8xf32>
    %c0_5 = arith.constant 0 : index
    %c0_6 = arith.constant 0 : index
    %6 = vector.load %arg12[%c0_5, %c0_6] : memref<392x8xf32, #tpu.memory_space<vmem>>, vector<392x8xf32>
    tpu.vector_store %arg12[%c0_5, %c0_6], %5 {strides = array<i32>} : memref<392x8xf32, #tpu.memory_space<vmem>>, vector<392x8xf32>,
    %c0_7 = arith.constant 0 : index
    %c0_8 = arith.constant 0 : index
    %7 = vector.load %arg6[%c0_7, %c0_8] : memref<392x1xf32, #tpu.memory_space<vmem>>, vector<392x1xf32>
    %8 = vector.broadcast %7 : vector<392x1xf32> to vector<392x8xf32>
    %9 = arith.mulf %5, %8 : vector<392x8xf32>
    %cst_9 = arith.constant dense<0.000000e+00> : vector<8xf32>
    %10 = vector.multi_reduction <add>, %9, %cst_9 [0] : vector<392x8xf32> to vector<8xf32>
    %11 = vector.shape_cast %10 : vector<8xf32> to vector<1x8xf32>
    %cst_10 = arith.constant 0.00617283955 : f32
    %12 = vector.broadcast %cst_10 : f32 to vector<1x8xf32>
    %13 = arith.mulf %11, %12 : vector<1x8xf32>
    %14 = vector.broadcast %13 : vector<1x8xf32> to vector<392x8xf32>
    %15 = arith.subf %5, %14 : vector<392x8xf32>
    %16 = arith.mulf %15, %15 : vector<392x8xf32>
    %17 = vector.broadcast %7 : vector<392x1xf32> to vector<392x8xf32>
    %18 = arith.mulf %16, %17 : vector<392x8xf32>
    %cst_11 = arith.constant dense<0.000000e+00> : vector<8xf32>
    %19 = vector.multi_reduction <add>, %18, %cst_11 [0] : vector<392x8xf32> to vector<8xf32>
    %20 = vector.shape_cast %19 : vector<8xf32> to vector<1x8xf32>
    %cst_12 = arith.constant 0.00617283955 : f32
    %21 = vector.broadcast %cst_12 : f32 to vector<1x8xf32>
    %22 = arith.mulf %20, %21 : vector<1x8xf32>
    %cst_13 = arith.constant 9.99999974E-6 : f32
    %23 = vector.broadcast %cst_13 : f32 to vector<1x8xf32>
    %24 = arith.addf %22, %23 : vector<1x8xf32>
    %25 = math.rsqrt %24 : vector<1x8xf32>
    %c0_14 = arith.constant 0 : index
    %c0_15 = arith.constant 0 : index
    %26 = vector.load %arg4[%c0_14, %c0_15] : memref<1x8xf32, #tpu.memory_space<vmem>>, vector<1x8xf32>
    %27 = arith.mulf %25, %26 : vector<1x8xf32>
    %28 = vector.broadcast %27 : vector<1x8xf32> to vector<392x8xf32>
    %29 = arith.mulf %15, %28 : vector<392x8xf32>
    %c0_16 = arith.constant 0 : index
    %c0_17 = arith.constant 0 : index
    %30 = vector.load %arg5[%c0_16, %c0_17] : memref<1x8xf32, #tpu.memory_space<vmem>>, vector<1x8xf32>
    %31 = vector.broadcast %30 : vector<1x8xf32> to vector<392x8xf32>
    %32 = arith.addf %29, %31 : vector<392x8xf32>
    %cst_18 = arith.constant 0.000000e+00 : f32
    %33 = vector.broadcast %cst_18 : f32 to vector<392x8xf32>
    %34 = arith.cmpf ogt, %32, %33 : vector<392x8xf32>
    %cst_19 = arith.constant 2.000000e-01 : f32
    %35 = vector.broadcast %cst_19 : f32 to vector<392x8xf32>
    %36 = arith.mulf %35, %32 : vector<392x8xf32>
    %37 = arith.select %34, %32, %36 : vector<392x8xi1>, vector<392x8xf32>
    %38 = vector.broadcast %7 : vector<392x1xf32> to vector<392x8xf32>
    %39 = arith.mulf %37, %38 : vector<392x8xf32>
    %40 = vector.extract_strided_slice %39 {offsets = [0, 0], sizes = [70, 8], strides = [1, 1]} : vector<392x8xf32> to vector<70x8xf32>
    %41 = vector.extract_strided_slice %39 {offsets = [98, 0], sizes = [70, 8], strides = [1, 1]} : vector<392x8xf32> to vector<70x8xf32>
    %42 = vector.extract_strided_slice %39 {offsets = [1, 0], sizes = [70, 8], strides = [1, 1]} : vector<392x8xf32> to vector<70x8xf32>
    %43 = vector.extract_strided_slice %39 {offsets = [99, 0], sizes = [70, 8], strides = [1, 1]} : vector<392x8xf32> to vector<70x8xf32>
    %44 = vector.extract_strided_slice %39 {offsets = [196, 0], sizes = [70, 8], strides = [1, 1]} : vector<392x8xf32> to vector<70x8xf32>
    %45 = vector.extract_strided_slice %39 {offsets = [294, 0], sizes = [70, 8], strides = [1, 1]} : vector<392x8xf32> to vector<70x8xf32>
    %46 = vector.extract_strided_slice %39 {offsets = [197, 0], sizes = [70, 8], strides = [1, 1]} : vector<392x8xf32> to vector<70x8xf32>
    %47 = vector.extract_strided_slice %39 {offsets = [295, 0], sizes = [70, 8], strides = [1, 1]} : vector<392x8xf32> to vector<70x8xf32>
    %48 = vector.extract_strided_slice %39 {offsets = [14, 0], sizes = [70, 8], strides = [1, 1]} : vector<392x8xf32> to vector<70x8xf32>
    %49 = vector.extract_strided_slice %39 {offsets = [112, 0], sizes = [70, 8], strides = [1, 1]} : vector<392x8xf32> to vector<70x8xf32>
    %50 = vector.extract_strided_slice %39 {offsets = [15, 0], sizes = [70, 8], strides = [1, 1]} : vector<392x8xf32> to vector<70x8xf32>
    %51 = vector.extract_strided_slice %39 {offsets = [113, 0], sizes = [70, 8], strides = [1, 1]} : vector<392x8xf32> to vector<70x8xf32>
    %52 = vector.extract_strided_slice %39 {offsets = [210, 0], sizes = [70, 8], strides = [1, 1]} : vector<392x8xf32> to vector<70x8xf32>
    %53 = vector.extract_strided_slice %39 {offsets = [308, 0], sizes = [70, 8], strides = [1, 1]} : vector<392x8xf32> to vector<70x8xf32>
    %54 = vector.extract_strided_slice %39 {offsets = [211, 0], sizes = [70, 8], strides = [1, 1]} : vector<392x8xf32> to vector<70x8xf32>
    %55 = vector.extract_strided_slice %39 {offsets = [309, 0], sizes = [70, 8], strides = [1, 1]} : vector<392x8xf32> to vector<70x8xf32>
    %56 = tpu.concatenate %40, %41, %42, %43, %44, %45, %46, %47, %48, %49, %50, %51, %52, %53, %54, %55 in 1 : vector<70x8xf32>, vector<70x8xf32>, vector<70x8xf32>, vector<70x8xf32>, vector<70x8xf32>, vector<70x8xf32>, vector<70x8xf32>, vector<70x8xf32>, vector<70x8xf32>, vector<70x8xf32>, vector<70x8xf32>, vector<70x8xf32>, vector<70x8xf32>, vector<70x8xf32>, vector<70x8xf32>, vector<70x8xf32> -> vector<70x128xf32>
    %57 = arith.truncf %56 : vector<70x128xf32> to vector<70x128xbf16>
    %c0_20 = arith.constant 0 : index
    %c0_21 = arith.constant 0 : index
    %58 = vector.load %arg7[%c0_20, %c0_21] : memref<128x16xbf16, #tpu.memory_space<vmem>>, vector<128x16xbf16>
    %cst_22 = arith.constant dense<0.000000e+00> : vector<70x16xf32>
    %59 = tpu.matmul %57, %58, %cst_22 {dimension_numbers = #tpu.dot_dimension_numbers<[1], [0], [0], [1], [0, 0, 1, 1], [], []>} : vector<70x128xbf16>, vector<128x16xbf16>, vector<70x16xf32> -> vector<70x16xf32>
    %c0_23 = arith.constant 0 : index
    %c0_24 = arith.constant 0 : index
    %60 = vector.load %arg8[%c0_23, %c0_24] : memref<1x16xf32, #tpu.memory_space<vmem>>, vector<1x16xf32>
    %61 = vector.broadcast %60 : vector<1x16xf32> to vector<70x16xf32>
    %62 = arith.addf %59, %61 : vector<70x16xf32>
    %c0_25 = arith.constant 0 : index
    %c0_26 = arith.constant 0 : index
    %63 = vector.load %arg13[%c0_25, %c0_26] : memref<70x16xf32, #tpu.memory_space<vmem>>, vector<70x16xf32>
    tpu.vector_store %arg13[%c0_25, %c0_26], %62 {strides = array<i32>} : memref<70x16xf32, #tpu.memory_space<vmem>>, vector<70x16xf32>,
    %c0_27 = arith.constant 0 : index
    %c0_28 = arith.constant 0 : index
    %64 = vector.load %arg11[%c0_27, %c0_28] : memref<70x1xf32, #tpu.memory_space<vmem>>, vector<70x1xf32>
    %65 = vector.broadcast %64 : vector<70x1xf32> to vector<70x16xf32>
    %66 = arith.mulf %62, %65 : vector<70x16xf32>
    %cst_29 = arith.constant dense<0.000000e+00> : vector<16xf32>
    %67 = vector.multi_reduction <add>, %66, %cst_29 [0] : vector<70x16xf32> to vector<16xf32>
    %68 = vector.shape_cast %67 : vector<16xf32> to vector<1x16xf32>
    %cst_30 = arith.constant 2.000000e-02 : f32
    %69 = vector.broadcast %cst_30 : f32 to vector<1x16xf32>
    %70 = arith.mulf %68, %69 : vector<1x16xf32>
    %71 = vector.broadcast %70 : vector<1x16xf32> to vector<70x16xf32>
    %72 = arith.subf %62, %71 : vector<70x16xf32>
    %73 = arith.mulf %72, %72 : vector<70x16xf32>
    %74 = vector.broadcast %64 : vector<70x1xf32> to vector<70x16xf32>
    %75 = arith.mulf %73, %74 : vector<70x16xf32>
    %cst_31 = arith.constant dense<0.000000e+00> : vector<16xf32>
    %76 = vector.multi_reduction <add>, %75, %cst_31 [0] : vector<70x16xf32> to vector<16xf32>
    %77 = vector.shape_cast %76 : vector<16xf32> to vector<1x16xf32>
    %cst_32 = arith.constant 2.000000e-02 : f32
    %78 = vector.broadcast %cst_32 : f32 to vector<1x16xf32>
    %79 = arith.mulf %77, %78 : vector<1x16xf32>
    %cst_33 = arith.constant 9.99999974E-6 : f32
    %80 = vector.broadcast %cst_33 : f32 to vector<1x16xf32>
    %81 = arith.addf %79, %80 : vector<1x16xf32>
    %82 = math.rsqrt %81 : vector<1x16xf32>
    %c0_34 = arith.constant 0 : index
    %c0_35 = arith.constant 0 : index
    %83 = vector.load %arg9[%c0_34, %c0_35] : memref<1x16xf32, #tpu.memory_space<vmem>>, vector<1x16xf32>
    %84 = arith.mulf %82, %83 : vector<1x16xf32>
    %85 = vector.broadcast %84 : vector<1x16xf32> to vector<70x16xf32>
    %86 = arith.mulf %72, %85 : vector<70x16xf32>
    %c0_36 = arith.constant 0 : index
    %c0_37 = arith.constant 0 : index
    %87 = vector.load %arg10[%c0_36, %c0_37] : memref<1x16xf32, #tpu.memory_space<vmem>>, vector<1x16xf32>
    %88 = vector.broadcast %87 : vector<1x16xf32> to vector<70x16xf32>
    %89 = arith.addf %86, %88 : vector<70x16xf32>
    %cst_38 = arith.constant 0.000000e+00 : f32
    %90 = vector.broadcast %cst_38 : f32 to vector<70x16xf32>
    %91 = arith.cmpf ogt, %89, %90 : vector<70x16xf32>
    %cst_39 = arith.constant 2.000000e-01 : f32
    %92 = vector.broadcast %cst_39 : f32 to vector<70x16xf32>
    %93 = arith.mulf %92, %89 : vector<70x16xf32>
    %94 = arith.select %91, %89, %93 : vector<70x16xi1>, vector<70x16xf32>
    %c0_40 = arith.constant 0 : index
    %c0_41 = arith.constant 0 : index
    %95 = vector.load %arg14[%c0_40, %c0_41] : memref<70x16xf32, #tpu.memory_space<vmem>>, vector<70x16xf32>
    tpu.vector_store %arg14[%c0_40, %c0_41], %94 {strides = array<i32>} : memref<70x16xf32, #tpu.memory_space<vmem>>, vector<70x16xf32>,
    return
  }
  func.func @transform_0(%arg0: i32) -> (i32, i32) {
    %c0_i32 = arith.constant 0 : i32
    %c0_i32_0 = arith.constant 0 : i32
    %c0_i32_1 = arith.constant 0 : i32
    return %c0_i32, %c0_i32_0 : i32, i32
  }
  func.func @transform_1(%arg0: i32) -> (i32, i32) {
    %c0_i32 = arith.constant 0 : i32
    %c0_i32_0 = arith.constant 0 : i32
    %c0_i32_1 = arith.constant 0 : i32
    return %c0_i32, %c0_i32_0 : i32, i32
  }
  func.func @transform_2(%arg0: i32) -> (i32, i32) {
    %c0_i32 = arith.constant 0 : i32
    %c0_i32_0 = arith.constant 0 : i32
    %c0_i32_1 = arith.constant 0 : i32
    return %c0_i32, %c0_i32_0 : i32, i32
  }
  func.func @transform_3(%arg0: i32) -> (i32, i32) {
    %c0_i32 = arith.constant 0 : i32
    %c0_i32_0 = arith.constant 0 : i32
    %c0_i32_1 = arith.constant 0 : i32
    return %c0_i32, %c0_i32_0 : i32, i32
  }
  func.func @transform_4(%arg0: i32) -> (i32, i32) {
    %c0_i32 = arith.constant 0 : i32
    %c0_i32_0 = arith.constant 0 : i32
    %c0_i32_1 = arith.constant 0 : i32
    return %c0_i32, %c0_i32_0 : i32, i32
  }
  func.func @transform_5(%arg0: i32) -> (i32, i32) {
    %c0_i32 = arith.constant 0 : i32
    %c0_i32_0 = arith.constant 0 : i32
    %c0_i32_1 = arith.constant 0 : i32
    return %c0_i32, %c0_i32_0 : i32, i32
  }
  func.func @transform_6(%arg0: i32) -> (i32, i32) {
    %c0_i32 = arith.constant 0 : i32
    %c0_i32_0 = arith.constant 0 : i32
    %c0_i32_1 = arith.constant 0 : i32
    return %c0_i32, %c0_i32_0 : i32, i32
  }
  func.func @transform_7(%arg0: i32) -> (i32, i32) {
    %c0_i32 = arith.constant 0 : i32
    %c0_i32_0 = arith.constant 0 : i32
    %c0_i32_1 = arith.constant 0 : i32
    return %c0_i32, %c0_i32_0 : i32, i32
  }
  func.func @transform_8(%arg0: i32) -> (i32, i32) {
    %c0_i32 = arith.constant 0 : i32
    %c0_i32_0 = arith.constant 0 : i32
    %c0_i32_1 = arith.constant 0 : i32
    return %c0_i32, %c0_i32_0 : i32, i32
  }
  func.func @transform_9(%arg0: i32) -> (i32, i32) {
    %c0_i32 = arith.constant 0 : i32
    %c0_i32_0 = arith.constant 0 : i32
    %c0_i32_1 = arith.constant 0 : i32
    return %c0_i32, %c0_i32_0 : i32, i32
  }
  func.func @transform_10(%arg0: i32) -> (i32, i32) {
    %c0_i32 = arith.constant 0 : i32
    %c0_i32_0 = arith.constant 0 : i32
    %c0_i32_1 = arith.constant 0 : i32
    return %c0_i32, %c0_i32_0 : i32, i32
  }
  func.func @transform_11(%arg0: i32) -> (i32, i32) {
    %c0_i32 = arith.constant 0 : i32
    %c0_i32_0 = arith.constant 0 : i32
    %c0_i32_1 = arith.constant 0 : i32
    return %c0_i32, %c0_i32_0 : i32, i32
  }
  func.func @transform_12(%arg0: i32) -> (i32, i32) {
    %c0_i32 = arith.constant 0 : i32
    %c0_i32_0 = arith.constant 0 : i32
    %c0_i32_1 = arith.constant 0 : i32
    return %c0_i32, %c0_i32_0 : i32, i32
  }
  func.func @transform_13(%arg0: i32) -> (i32, i32) {
    %c0_i32 = arith.constant 0 : i32
    %c0_i32_0 = arith.constant 0 : i32
    %c0_i32_1 = arith.constant 0 : i32
    return %c0_i32, %c0_i32_0 : i32, i32
  }
}

</mosaic_0001>

<llo_original>
// kernel: patch_discriminator_forward.1
$region0: #{patch_discriminator_forward.1}
  #allocation0 [shape = 'u32[]', space=smem, size = 0x4, offset = 0x4, fixed_abs, tag = 'smem constant byte address 0x4 - core index']
  #allocation1 [shape = 'u32[144,128]{1,0:T(1,128)}', space=vmem, size = 0x12000, scoped, tag = 'internal scratch']
  %s0 = inlined_call_operand.vmem [shape: bf16[392,64], index: 0, kind: input, shape index: {}]
  %s1 = inlined_call_operand.vmem [shape: bf16[64,8], index: 1, kind: input, shape index: {}]
  %s2 = inlined_call_operand.vmem [shape: f32[1,8], index: 2, kind: input, shape index: {}]
  %s3 = inlined_call_operand.vmem [shape: f32[1,8], index: 3, kind: input, shape index: {}]
  %s4 = inlined_call_operand.vmem [shape: f32[1,8], index: 4, kind: input, shape index: {}]
  %s5 = inlined_call_operand.vmem [shape: f32[392,1], index: 5, kind: input, shape index: {}]
  %s6 = inlined_call_operand.vmem [shape: bf16[128,16], index: 6, kind: input, shape index: {}]
  %s7 = inlined_call_operand.vmem [shape: f32[1,16], index: 7, kind: input, shape index: {}]
  %s8 = inlined_call_operand.vmem [shape: f32[1,16], index: 8, kind: input, shape index: {}]
  %s9 = inlined_call_operand.vmem [shape: f32[1,16], index: 9, kind: input, shape index: {}]
  %s10 = inlined_call_operand.vmem [shape: f32[70,1], index: 10, kind: input, shape index: {}]
  %s11 = inlined_call_operand.vmem [shape: f32[392,8], index: 11, kind: output, shape index: {0}]
  %s12 = inlined_call_operand.vmem [shape: f32[70,16], index: 12, kind: output, shape index: {1}]
  %s13 = inlined_call_operand.vmem [shape: f32[70,16], index: 13, kind: output, shape index: {2}]
  %14 = xla_tuple %s11, %s12, %s13
  %s15 = sld [smem:[#allocation0]]
  $region70: #{patch_discriminator_forward.1} parent=0
    _
  %s17 = ssub.s32 1, %s15
  %s18 = scalar_select 0, %s17, %s15
  // Predicated region
  $region2: #{patch_discriminator_forward.1} parent=0 // pred_check
    _
  $region3: #{patch_discriminator_forward.1} parent=0 // pred_check_branch
    %20 = sbr.rel (0) target = $region5
  $region4: #{patch_discriminator_forward.1} parent=0 // pred_region
    _
  $region5: #{patch_discriminator_forward.1} parent=0 // pred_fallthru
    _
  // Predicated region
  $region6: #{patch_discriminator_forward.1} parent=0 // pred_check
    _
  $region7: #{patch_discriminator_forward.1} parent=0 // pred_check_branch
    %22 = sbr.rel (0) target = $region9
  $region8: #{patch_discriminator_forward.1} parent=0 // pred_region
    _
  $region9: #{patch_discriminator_forward.1} parent=0 // pred_fallthru
    _
  // Predicated region
  $region10: #{patch_discriminator_forward.1} parent=0 // pred_check
    _
  $region11: #{patch_discriminator_forward.1} parent=0 // pred_check_branch
    %24 = sbr.rel (0) target = $region13
  $region12: #{patch_discriminator_forward.1} parent=0 // pred_region
    _
  $region13: #{patch_discriminator_forward.1} parent=0 // pred_fallthru
    _
  // Predicated region
  $region14: #{patch_discriminator_forward.1} parent=0 // pred_check
    _
  $region15: #{patch_discriminator_forward.1} parent=0 // pred_check_branch
    %26 = sbr.rel (0) target = $region17
  $region16: #{patch_discriminator_forward.1} parent=0 // pred_region
    _
  $region17: #{patch_discriminator_forward.1} parent=0 // pred_fallthru
    _
  // Predicated region
  $region18: #{patch_discriminator_forward.1} parent=0 // pred_check
    _
  $region19: #{patch_discriminator_forward.1} parent=0 // pred_check_branch
    %28 = sbr.rel (0) target = $region21
  $region20: #{patch_discriminator_forward.1} parent=0 // pred_region
    _
  $region21: #{patch_discriminator_forward.1} parent=0 // pred_fallthru
    _
  // Predicated region
  $region22: #{patch_discriminator_forward.1} parent=0 // pred_check
    _
  $region23: #{patch_discriminator_forward.1} parent=0 // pred_check_branch
    %30 = sbr.rel (0) target = $region25
  $region24: #{patch_discriminator_forward.1} parent=0 // pred_region
    _
  $region25: #{patch_discriminator_forward.1} parent=0 // pred_fallthru
    _
  // Predicated region
  $region26: #{patch_discriminator_forward.1} parent=0 // pred_check
    _
  $region27: #{patch_discriminator_forward.1} parent=0 // pred_check_branch
    %32 = sbr.rel (0) target = $region29
  $region28: #{patch_discriminator_forward.1} parent=0 // pred_region
    _
  $region29: #{patch_discriminator_forward.1} parent=0 // pred_fallthru
    _
  // Predicated region
  $region30: #{patch_discriminator_forward.1} parent=0 // pred_check
    _
  $region31: #{patch_discriminator_forward.1} parent=0 // pred_check_branch
    %34 = sbr.rel (0) target = $region33
  $region32: #{patch_discriminator_forward.1} parent=0 // pred_region
    _
  $region33: #{patch_discriminator_forward.1} parent=0 // pred_fallthru
    _
  // Predicated region
  $region34: #{patch_discriminator_forward.1} parent=0 // pred_check
    _
  $region35: #{patch_discriminator_forward.1} parent=0 // pred_check_branch
    %36 = sbr.rel (0) target = $region37
  $region36: #{patch_discriminator_forward.1} parent=0 // pred_region
    _
  $region37: #{patch_discriminator_forward.1} parent=0 // pred_fallthru
    _
  // Predicated region
  $region38: #{patch_discriminator_forward.1} parent=0 // pred_check
    _
  $region39: #{patch_discriminator_forward.1} parent=0 // pred_check_branch
    %38 = sbr.rel (0) target = $region41
  $region40: #{patch_discriminator_forward.1} parent=0 // pred_region
    _
  $region41: #{patch_discriminator_forward.1} parent=0 // pred_fallthru
    _
  // Predicated region
  $region42: #{patch_discriminator_forward.1} parent=0 // pred_check
    _
  $region43: #{patch_discriminator_forward.1} parent=0 // pred_check_branch
    %40 = sbr.rel (0) target = $region45
  $region44: #{patch_discriminator_forward.1} parent=0 // pred_region
    _
  $region45: #{patch_discriminator_forward.1} parent=0 // pred_fallthru
    _
  %v42 = vld [vmem:[%s0] sm:$0xf]
  %v43 = vld [vmem:[%s0 + $0x4] sm:$0xf]
  %v44 = vld [vmem:[%s0 + $0x8] sm:$0xf]
  %v45 = vld [vmem:[%s0 + $0xc] sm:$0xf]
  %v46 = vld [vmem:[%s0 + $0x10] sm:$0xf]
  %v47 = vld [vmem:[%s0 + $0x14] sm:$0xf]
  %v48 = vld [vmem:[%s0 + $0x18] sm:$0xf]
  %v49 = vld [vmem:[%s0 + $0x1c] sm:$0xf]
  %v50 = vld [vmem:[%s0 + $0x20] sm:$0xf]
  %v51 = vld [vmem:[%s0 + $0x24] sm:$0xf]
  %v52 = vld [vmem:[%s0 + $0x28] sm:$0xf]
  %v53 = vld [vmem:[%s0 + $0x2c] sm:$0xf]
  %v54 = vld [vmem:[%s0 + $0x30] sm:$0xf]
  %v55 = vld [vmem:[%s0 + $0x34] sm:$0xf]
  %v56 = vld [vmem:[%s0 + $0x38] sm:$0xf]
  %v57 = vld [vmem:[%s0 + $0x3c] sm:$0xf]
  %v58 = vld [vmem:[%s0 + $0x40] sm:$0xf]
  %v59 = vld [vmem:[%s0 + $0x44] sm:$0xf]
  %v60 = vld [vmem:[%s0 + $0x48] sm:$0xf]
  %v61 = vld [vmem:[%s0 + $0x4c] sm:$0xf]
  %v62 = vld [vmem:[%s0 + $0x50] sm:$0xf]
  %v63 = vld [vmem:[%s0 + $0x54] sm:$0xf]
  %v64 = vld [vmem:[%s0 + $0x58] sm:$0xf]
  %v65 = vld [vmem:[%s0 + $0x5c] sm:$0xf]
  %v66 = vld [vmem:[%s0 + $0x60] sm:$0xf]
  %v67 = vld [vmem:[%s0 + $0x64] sm:$0xf]
  %v68 = vld [vmem:[%s0 + $0x68] sm:$0xf]
  %v69 = vld [vmem:[%s0 + $0x6c] sm:$0xf]
  %v70 = vld [vmem:[%s0 + $0x70] sm:$0xf]
  %v71 = vld [vmem:[%s0 + $0x74] sm:$0xf]
  %v72 = vld [vmem:[%s0 + $0x78] sm:$0xf]
  %v73 = vld [vmem:[%s0 + $0x7c] sm:$0xf]
  %v74 = vld [vmem:[%s0 + $0x80] sm:$0xf]
  %v75 = vld [vmem:[%s0 + $0x84] sm:$0xf]
  %v76 = vld [vmem:[%s0 + $0x88] sm:$0xf]
  %v77 = vld [vmem:[%s0 + $0x8c] sm:$0xf]
  %v78 = vld [vmem:[%s0 + $0x90] sm:$0xf]
  %v79 = vld [vmem:[%s0 + $0x94] sm:$0xf]
  %v80 = vld [vmem:[%s0 + $0x98] sm:$0xf]
  %v81 = vld [vmem:[%s0 + $0x9c] sm:$0xf]
  %v82 = vld [vmem:[%s0 + $0xa0] sm:$0xf]
  %v83 = vld [vmem:[%s0 + $0xa4] sm:$0xf]
  %v84 = vld [vmem:[%s0 + $0xa8] sm:$0xf]
  %v85 = vld [vmem:[%s0 + $0xac] sm:$0xf]
  %v86 = vld [vmem:[%s0 + $0xb0] sm:$0xf]
  %v87 = vld [vmem:[%s0 + $0xb4] sm:$0xf]
  %v88 = vld [vmem:[%s0 + $0xb8] sm:$0xf]
  %v89 = vld [vmem:[%s0 + $0xbc] sm:$0xf]
  %v90 = vld [vmem:[%s0 + $0xc0] sm:$0xf]
  %v91 = vld [vmem:[%s1] sm:$0xf]
  %v92 = vld [vmem:[%s1 + $0x4] sm:$0xf]
  %v93 = vld [vmem:[%s1 + $0x8] sm:$0xf]
  %v94 = vld [vmem:[%s1 + $0xc] sm:$0xf]
  %v95 = vld [vmem:[%s1 + $0x10] sm:$0xf]
  %v96 = vld [vmem:[%s1 + $0x14] sm:$0xf]
  %v97 = vld [vmem:[%s1 + $0x18] sm:$0xf]
  %v98 = vld [vmem:[%s1 + $0x1c] sm:$0xf]
  %v99 = vld [vmem:[%s2] sm:$0x1]
  %v101 = vlaneseq
  %v102 = vshrl.u32 %v101, 7
  %v103 = vsub.s32 0, %v102
  %v104 = vrot.slane %v99, %v103
  %v155 = vunpack.c.l.b16 %v42
  %v156 = vunpack.c.l.b16 %v43
  %v157 = vunpack.c.l.b16 %v44
  %v158 = vunpack.c.l.b16 %v45
  %v159 = vunpack.c.l.b16 %v46
  %v160 = vunpack.c.l.b16 %v47
  %v161 = vunpack.c.l.b16 %v48
  %v162 = vunpack.c.l.b16 %v49
  %v163 = vunpack.c.l.b16 %v50
  %v164 = vunpack.c.l.b16 %v51
  %v165 = vunpack.c.l.b16 %v52
  %v166 = vunpack.c.l.b16 %v53
  %v167 = vunpack.c.l.b16 %v54
  %v168 = vunpack.c.l.b16 %v55
  %v169 = vunpack.c.l.b16 %v56
  %v170 = vunpack.c.l.b16 %v57
  %v171 = vunpack.c.l.b16 %v58
  %v172 = vunpack.c.l.b16 %v59
  %v173 = vunpack.c.l.b16 %v60
  %v174 = vunpack.c.l.b16 %v61
  %v175 = vunpack.c.l.b16 %v62
  %v176 = vunpack.c.l.b16 %v63
  %v177 = vunpack.c.l.b16 %v64
  %v178 = vunpack.c.l.b16 %v65
  %v179 = vunpack.c.l.b16 %v66
  %v180 = vunpack.c.l.b16 %v67
  %v181 = vunpack.c.l.b16 %v68
  %v182 = vunpack.c.l.b16 %v69
  %v183 = vunpack.c.l.b16 %v70
  %v184 = vunpack.c.l.b16 %v71
  %v185 = vunpack.c.l.b16 %v72
  %v186 = vunpack.c.l.b16 %v73
  %v187 = vunpack.c.l.b16 %v74
  %v188 = vunpack.c.l.b16 %v75
  %v189 = vunpack.c.l.b16 %v76
  %v190 = vunpack.c.l.b16 %v77
  %v191 = vunpack.c.l.b16 %v78
  %v192 = vunpack.c.l.b16 %v79
  %v193 = vunpack.c.l.b16 %v80
  %v194 = vunpack.c.l.b16 %v81
  %v195 = vunpack.c.l.b16 %v82
  %v196 = vunpack.c.l.b16 %v83
  %v197 = vunpack.c.l.b16 %v84
  %v198 = vunpack.c.l.b16 %v85
  %v199 = vunpack.c.l.b16 %v86
  %v200 = vunpack.c.l.b16 %v87
  %v201 = vunpack.c.l.b16 %v88
  %v202 = vunpack.c.l.b16 %v89
  %v203 = vunpack.c.l.b16 %v90
  %v204 = vpack.c.b16 %v156, %v155
  %v205 = vpack.c.b16 %v158, %v157
  %v206 = vpack.c.b16 %v160, %v159
  %v207 = vpack.c.b16 %v162, %v161
  %v208 = vpack.c.b16 %v164, %v163
  %v209 = vpack.c.b16 %v166, %v165
  %v210 = vpack.c.b16 %v168, %v167
  %v211 = vpack.c.b16 %v170, %v169
  %v212 = vpack.c.b16 %v172, %v171
  %v213 = vpack.c.b16 %v174, %v173
  %v214 = vpack.c.b16 %v176, %v175
  %v215 = vpack.c.b16 %v178, %v177
  %v216 = vpack.c.b16 %v180, %v179
  %v217 = vpack.c.b16 %v182, %v181
  %v218 = vpack.c.b16 %v184, %v183
  %v219 = vpack.c.b16 %v186, %v185
  %v220 = vpack.c.b16 %v188, %v187
  %v221 = vpack.c.b16 %v190, %v189
  %v222 = vpack.c.b16 %v192, %v191
  %v223 = vpack.c.b16 %v194, %v193
  %v224 = vpack.c.b16 %v196, %v195
  %v225 = vpack.c.b16 %v198, %v197
  %v226 = vpack.c.b16 %v200, %v199
  %v227 = vpack.c.b16 %v202, %v201
  %v228 = vpack.c.b16 %v203, %v203
  %v237 = vunpack.c.l.b16 %v91
  %v238 = vunpack.c.l.b16 %v92
  %v239 = vunpack.c.l.b16 %v93
  %v240 = vunpack.c.l.b16 %v94
  %v241 = vunpack.c.l.b16 %v95
  %v242 = vunpack.c.l.b16 %v96
  %v243 = vunpack.c.l.b16 %v97
  %v244 = vunpack.c.l.b16 %v98
  %v245 = vpack.c.b16 %v238, %v237
  %v246 = vpack.c.b16 %v240, %v239
  %v247 = vpack.c.b16 %v242, %v241
  %v248 = vpack.c.b16 %v244, %v243
  %vm253 = vcmask 523264
  %v255 = vsel %vm253, %v204, 0
  %v258 = vsel %vm253, %v205, 0
  %v261 = vsel %vm253, %v206, 0
  %v264 = vsel %vm253, %v207, 0
  %v267 = vsel %vm253, %v208, 0
  %v270 = vsel %vm253, %v209, 0
  %v273 = vsel %vm253, %v210, 0
  %v276 = vsel %vm253, %v211, 0
  %v279 = vsel %vm253, %v212, 0
  %v282 = vsel %vm253, %v213, 0
  %v285 = vsel %vm253, %v214, 0
  %v288 = vsel %vm253, %v215, 0
  %v291 = vsel %vm253, %v216, 0
  %v294 = vsel %vm253, %v217, 0
  %v297 = vsel %vm253, %v218, 0
  %v300 = vsel %vm253, %v219, 0
  %v303 = vsel %vm253, %v220, 0
  %v306 = vsel %vm253, %v221, 0
  %v309 = vsel %vm253, %v222, 0
  %v312 = vsel %vm253, %v223, 0
  %v315 = vsel %vm253, %v224, 0
  %v318 = vsel %vm253, %v225, 0
  %v321 = vsel %vm253, %v226, 0
  %v324 = vsel %vm253, %v227, 0
  %v327 = vsel %vm253, %v228, 0
  %329 = vmatprep.subr.bf16.mxu0 0
  %330 = vmatpush1.bf16.msra.mxu0 %v245
  %331 = vmatprep.subr.bf16.mxu0 0
  %332 = vmatpush1.bf16.msra.mxu0 %v246
  %333 = vmatprep.subr.bf16.mxu0 0
  %334 = vmatpush1.bf16.msra.mxu0 %v247
  %335 = vmatprep.subr.bf16.mxu0 0
  %336 = vmatpush1.bf16.msra.mxu0 %v248
  %337 = vmatprep.subr.bf16.mxu0 0
  %338 = vmatpush1.bf16.msra.mxu0 0
  %339 = vmatprep.subr.bf16.mxu0 0
  %340 = vmatpush1.bf16.msra.mxu0 0
  %341 = vmatprep.subr.bf16.mxu0 0
  %342 = vmatpush1.bf16.msra.mxu0 0
  %343 = vmatprep.subr.bf16.mxu0 0
  %344 = vmatpush1.bf16.msra.mxu0 0
  %345 = vmatprep.subr.bf16.mxu0 0
  %346 = vmatpush1.bf16.msra.mxu0 0
  %347 = vmatprep.subr.bf16.mxu0 0
  %348 = vmatpush1.bf16.msra.mxu0 0
  %349 = vmatprep.subr.bf16.mxu0 0
  %350 = vmatpush1.bf16.msra.mxu0 0
  %351 = vmatprep.subr.bf16.mxu0 0
  %352 = vmatpush1.bf16.msra.mxu0 0
  %353 = vmatprep.subr.bf16.mxu0 0
  %354 = vmatpush1.bf16.msra.mxu0 0
  %355 = vmatprep.subr.bf16.mxu0 0
  %356 = vmatpush1.bf16.msra.mxu0 0
  %357 = vmatprep.subr.bf16.mxu0 0
  %358 = vmatpush1.bf16.msra.mxu0 0
  %359 = vmatprep.subr.bf16.mxu0 0
  %360 = vmatpush1.bf16.msra.mxu0 0
  %361 = vmatprep.mubr.bf16.mxu0 0
  %362 = vmatmul.mubr.bf16.gmra.mrb[0].mxu0 %v255
  %v363 = vpop.f32.mrb[0].mxu0
  %v364 = vadd.f32 %v104, %v363
  %v365 = vpop.f32.mrb[0].mxu0
  %v366 = vpop.f32.mrb[0].mxu0
  %v367 = vadd.f32 %v104, %v366
  %v368 = vpop.f32.mrb[0].mxu0
  %369 = vmatprep.mubr.bf16.mxu0 0
  %370 = vmatmul.mubr.bf16.gmra.mrb[0].mxu0 %v258
  %v371 = vpop.f32.mrb[0].mxu0
  %v372 = vadd.f32 %v104, %v371
  %v373 = vpop.f32.mrb[0].mxu0
  %v374 = vpop.f32.mrb[0].mxu0
  %v375 = vadd.f32 %v104, %v374
  %v376 = vpop.f32.mrb[0].mxu0
  %377 = vmatprep.mubr.bf16.mxu0 0
  %378 = vmatmul.mubr.bf16.gmra.mrb[0].mxu0 %v261
  %v379 = vpop.f32.mrb[0].mxu0
  %v380 = vadd.f32 %v104, %v379
  %v381 = vpop.f32.mrb[0].mxu0
  %v382 = vpop.f32.mrb[0].mxu0
  %v383 = vadd.f32 %v104, %v382
  %v384 = vpop.f32.mrb[0].mxu0
  %385 = vmatprep.mubr.bf16.mxu0 0
  %386 = vmatmul.mubr.bf16.gmra.mrb[0].mxu0 %v264
  %v387 = vpop.f32.mrb[0].mxu0
  %v388 = vadd.f32 %v104, %v387
  %v389 = vpop.f32.mrb[0].mxu0
  %v390 = vpop.f32.mrb[0].mxu0
  %v391 = vadd.f32 %v104, %v390
  %v392 = vpop.f32.mrb[0].mxu0
  %393 = vmatprep.mubr.bf16.mxu0 0
  %394 = vmatmul.mubr.bf16.gmra.mrb[0].mxu0 %v267
  %v395 = vpop.f32.mrb[0].mxu0
  %v396 = vadd.f32 %v104, %v395
  %v397 = vpop.f32.mrb[0].mxu0
  %v398 = vpop.f32.mrb[0].mxu0
  %v399 = vadd.f32 %v104, %v398
  %v400 = vpop.f32.mrb[0].mxu0
  %401 = vmatprep.mubr.bf16.mxu0 0
  %402 = vmatmul.mubr.bf16.gmra.mrb[0].mxu0 %v270
  %v403 = vpop.f32.mrb[0].mxu0
  %v404 = vadd.f32 %v104, %v403
  %v405 = vpop.f32.mrb[0].mxu0
  %v406 = vpop.f32.mrb[0].mxu0
  %v407 = vadd.f32 %v104, %v406
  %v408 = vpop.f32.mrb[0].mxu0
  %409 = vmatprep.mubr.bf16.mxu0 0
  %410 = vmatmul.mubr.bf16.gmra.mrb[0].mxu0 %v273
  %v411 = vpop.f32.mrb[0].mxu0
  %v412 = vadd.f32 %v104, %v411
  %v413 = vpop.f32.mrb[0].mxu0
  %v414 = vpop.f32.mrb[0].mxu0
  %v415 = vadd.f32 %v104, %v414
  %v416 = vpop.f32.mrb[0].mxu0
  %417 = vmatprep.mubr.bf16.mxu0 0
  %418 = vmatmul.mubr.bf16.gmra.mrb[0].mxu0 %v276
  %v419 = vpop.f32.mrb[0].mxu0
  %v420 = vadd.f32 %v104, %v419
  %v421 = vpop.f32.mrb[0].mxu0
  %v422 = vpop.f32.mrb[0].mxu0
  %v423 = vadd.f32 %v104, %v422
  %v424 = vpop.f32.mrb[0].mxu0
  %425 = vmatprep.mubr.bf16.mxu0 0
  %426 = vmatmul.mubr.bf16.gmra.mrb[0].mxu0 %v279
  %v427 = vpop.f32.mrb[0].mxu0
  %v428 = vadd.f32 %v104, %v427
  %v429 = vpop.f32.mrb[0].mxu0
  %v430 = vpop.f32.mrb[0].mxu0
  %v431 = vadd.f32 %v104, %v430
  %v432 = vpop.f32.mrb[0].mxu0
  %433 = vmatprep.mubr.bf16.mxu0 0
  %434 = vmatmul.mubr.bf16.gmra.mrb[0].mxu0 %v282
  %v435 = vpop.f32.mrb[0].mxu0
  %v436 = vadd.f32 %v104, %v435
  %v437 = vpop.f32.mrb[0].mxu0
  %v438 = vpop.f32.mrb[0].mxu0
  %v439 = vadd.f32 %v104, %v438
  %v440 = vpop.f32.mrb[0].mxu0
  %441 = vmatprep.mubr.bf16.mxu0 0
  %442 = vmatmul.mubr.bf16.gmra.mrb[0].mxu0 %v285
  %v443 = vpop.f32.mrb[0].mxu0
  %v444 = vadd.f32 %v104, %v443
  %v445 = vpop.f32.mrb[0].mxu0
  %v446 = vpop.f32.mrb[0].mxu0
  %v447 = vadd.f32 %v104, %v446
  %v448 = vpop.f32.mrb[0].mxu0
  %449 = vmatprep.mubr.bf16.mxu0 0
  %450 = vmatmul.mubr.bf16.gmra.mrb[0].mxu0 %v288
  %v451 = vpop.f32.mrb[0].mxu0
  %v452 = vadd.f32 %v104, %v451
  %v453 = vpop.f32.mrb[0].mxu0
  %v454 = vpop.f32.mrb[0].mxu0
  %v455 = vadd.f32 %v104, %v454
  %v456 = vpop.f32.mrb[0].mxu0
  %457 = vmatprep.mubr.bf16.mxu0 0
  %458 = vmatmul.mubr.bf16.gmra.mrb[0].mxu0 %v291
  %v459 = vpop.f32.mrb[0].mxu0
  %v460 = vadd.f32 %v104, %v459
  %v461 = vpop.f32.mrb[0].mxu0
  %v462 = vpop.f32.mrb[0].mxu0
  %v463 = vadd.f32 %v104, %v462
  %v464 = vpop.f32.mrb[0].mxu0
  %465 = vmatprep.mubr.bf16.mxu0 0
  %466 = vmatmul.mubr.bf16.gmra.mrb[0].mxu0 %v294
  %v467 = vpop.f32.mrb[0].mxu0
  %v468 = vadd.f32 %v104, %v467
  %v469 = vpop.f32.mrb[0].mxu0
  %v470 = vpop.f32.mrb[0].mxu0
  %v471 = vadd.f32 %v104, %v470
  %v472 = vpop.f32.mrb[0].mxu0
  %473 = vmatprep.mubr.bf16.mxu0 0
  %474 = vmatmul.mubr.bf16.gmra.mrb[0].mxu0 %v297
  %v475 = vpop.f32.mrb[0].mxu0
  %v476 = vadd.f32 %v104, %v475
  %v477 = vpop.f32.mrb[0].mxu0
  %v478 = vpop.f32.mrb[0].mxu0
  %v479 = vadd.f32 %v104, %v478
  %v480 = vpop.f32.mrb[0].mxu0
  %481 = vmatprep.mubr.bf16.mxu0 0
  %482 = vmatmul.mubr.bf16.gmra.mrb[0].mxu0 %v300
  %v483 = vpop.f32.mrb[0].mxu0
  %v484 = vadd.f32 %v104, %v483
  %v485 = vpop.f32.mrb[0].mxu0
  %v486 = vpop.f32.mrb[0].mxu0
  %v487 = vadd.f32 %v104, %v486
  %v488 = vpop.f32.mrb[0].mxu0
  %489 = vmatprep.mubr.bf16.mxu0 0
  %490 = vmatmul.mubr.bf16.gmra.mrb[0].mxu0 %v303
  %v491 = vpop.f32.mrb[0].mxu0
  %v492 = vadd.f32 %v104, %v491
  %v493 = vpop.f32.mrb[0].mxu0
  %v494 = vpop.f32.mrb[0].mxu0
  %v495 = vadd.f32 %v104, %v494
  %v496 = vpop.f32.mrb[0].mxu0
  %497 = vmatprep.mubr.bf16.mxu0 0
  %498 = vmatmul.mubr.bf16.gmra.mrb[0].mxu0 %v306
  %v499 = vpop.f32.mrb[0].mxu0
  %v500 = vadd.f32 %v104, %v499
  %v501 = vpop.f32.mrb[0].mxu0
  %v502 = vpop.f32.mrb[0].mxu0
  %v503 = vadd.f32 %v104, %v502
  %v504 = vpop.f32.mrb[0].mxu0
  %505 = vmatprep.mubr.bf16.mxu0 0
  %506 = vmatmul.mubr.bf16.gmra.mrb[0].mxu0 %v309
  %v507 = vpop.f32.mrb[0].mxu0
  %v508 = vadd.f32 %v104, %v507
  %v509 = vpop.f32.mrb[0].mxu0
  %v510 = vpop.f32.mrb[0].mxu0
  %v511 = vadd.f32 %v104, %v510
  %v512 = vpop.f32.mrb[0].mxu0
  %513 = vmatprep.mubr.bf16.mxu0 0
  %514 = vmatmul.mubr.bf16.gmra.mrb[0].mxu0 %v312
  %v515 = vpop.f32.mrb[0].mxu0
  %v516 = vadd.f32 %v104, %v515
  %v517 = vpop.f32.mrb[0].mxu0
  %v518 = vpop.f32.mrb[0].mxu0
  %v519 = vadd.f32 %v104, %v518
  %v520 = vpop.f32.mrb[0].mxu0
  %521 = vmatprep.mubr.bf16.mxu0 0
  %522 = vmatmul.mubr.bf16.gmra.mrb[0].mxu0 %v315
  %v523 = vpop.f32.mrb[0].mxu0
  %v524 = vadd.f32 %v104, %v523
  %v525 = vpop.f32.mrb[0].mxu0
  %v526 = vpop.f32.mrb[0].mxu0
  %v527 = vadd.f32 %v104, %v526
  %v528 = vpop.f32.mrb[0].mxu0
  %529 = vmatprep.mubr.bf16.mxu0 0
  %530 = vmatmul.mubr.bf16.gmra.mrb[0].mxu0 %v318
  %v531 = vpop.f32.mrb[0].mxu0
  %v532 = vadd.f32 %v104, %v531
  %v533 = vpop.f32.mrb[0].mxu0
  %v534 = vpop.f32.mrb[0].mxu0
  %v535 = vadd.f32 %v104, %v534
  %v536 = vpop.f32.mrb[0].mxu0
  %537 = vmatprep.mubr.bf16.mxu0 0
  %538 = vmatmul.mubr.bf16.gmra.mrb[0].mxu0 %v321
  %v539 = vpop.f32.mrb[0].mxu0
  %v540 = vadd.f32 %v104, %v539
  %v541 = vpop.f32.mrb[0].mxu0
  %v542 = vpop.f32.mrb[0].mxu0
  %v543 = vadd.f32 %v104, %v542
  %v544 = vpop.f32.mrb[0].mxu0
  %545 = vmatprep.mubr.bf16.mxu0 0
  %546 = vmatmul.mubr.bf16.gmra.mrb[0].mxu0 %v324
  %v547 = vpop.f32.mrb[0].mxu0
  %v548 = vadd.f32 %v104, %v547
  %v549 = vpop.f32.mrb[0].mxu0
  %v550 = vpop.f32.mrb[0].mxu0
  %v551 = vadd.f32 %v104, %v550
  %v552 = vpop.f32.mrb[0].mxu0
  %553 = vmatprep.mubr.bf16.mxu0 0
  %554 = vmatmul.mubr.bf16.gmra.mrb[0].mxu0 %v327
  %v555 = vpop.f32.mrb[0].mxu0
  %v556 = vadd.f32 %v104, %v555
  %v557 = vpop.f32.mrb[0].mxu0
  %v558 = vpop.f32.mrb[0].mxu0
  %v559 = vpop.f32.mrb[0].mxu0
  %560 = vdwg.mxu0
  %vm561 = vcmask 64512
  %562 = vst.msk [vmem:[%s11] sm:$0xff] %vm561, %v364
  %563 = vst.msk [vmem:[%s11 + $0x8] sm:$0xff] %vm561, %v367
  %564 = vst.msk [vmem:[%s11 + $0x10] sm:$0xff] %vm561, %v372
  %565 = vst.msk [vmem:[%s11 + $0x18] sm:$0xff] %vm561, %v375
  %566 = vst.msk [vmem:[%s11 + $0x20] sm:$0xff] %vm561, %v380
  %567 = vst.msk [vmem:[%s11 + $0x28] sm:$0xff] %vm561, %v383
  %568 = vst.msk [vmem:[%s11 + $0x30] sm:$0xff] %vm561, %v388
  %569 = vst.msk [vmem:[%s11 + $0x38] sm:$0xff] %vm561, %v391
  %570 = vst.msk [vmem:[%s11 + $0x40] sm:$0xff] %vm561, %v396
  %571 = vst.msk [vmem:[%s11 + $0x48] sm:$0xff] %vm561, %v399
  %572 = vst.msk [vmem:[%s11 + $0x50] sm:$0xff] %vm561, %v404
  %573 = vst.msk [vmem:[%s11 + $0x58] sm:$0xff] %vm561, %v407
  %574 = vst.msk [vmem:[%s11 + $0x60] sm:$0xff] %vm561, %v412
  %575 = vst.msk [vmem:[%s11 + $0x68] sm:$0xff] %vm561, %v415
  %576 = vst.msk [vmem:[%s11 + $0x70] sm:$0xff] %vm561, %v420
  %577 = vst.msk [vmem:[%s11 + $0x78] sm:$0xff] %vm561, %v423
  %578 = vst.msk [vmem:[%s11 + $0x80] sm:$0xff] %vm561, %v428
  %579 = vst.msk [vmem:[%s11 + $0x88] sm:$0xff] %vm561, %v431
  %580 = vst.msk [vmem:[%s11 + $0x90] sm:$0xff] %vm561, %v436
  %581 = vst.msk [vmem:[%s11 + $0x98] sm:$0xff] %vm561, %v439
  %582 = vst.msk [vmem:[%s11 + $0xa0] sm:$0xff] %vm561, %v444
  %583 = vst.msk [vmem:[%s11 + $0xa8] sm:$0xff] %vm561, %v447
  %584 = vst.msk [vmem:[%s11 + $0xb0] sm:$0xff] %vm561, %v452
  %585 = vst.msk [vmem:[%s11 + $0xb8] sm:$0xff] %vm561, %v455
  %586 = vst.msk [vmem:[%s11 + $0xc0] sm:$0xff] %vm561, %v460
  %587 = vst.msk [vmem:[%s11 + $0xc8] sm:$0xff] %vm561, %v463
  %588 = vst.msk [vmem:[%s11 + $0xd0] sm:$0xff] %vm561, %v468
  %589 = vst.msk [vmem:[%s11 + $0xd8] sm:$0xff] %vm561, %v471
  %590 = vst.msk [vmem:[%s11 + $0xe0] sm:$0xff] %vm561, %v476
  %591 = vst.msk [vmem:[%s11 + $0xe8] sm:$0xff] %vm561, %v479
  %592 = vst.msk [vmem:[%s11 + $0xf0] sm:$0xff] %vm561, %v484
  %593 = vst.msk [vmem:[%s11 + $0xf8] sm:$0xff] %vm561, %v487
  %594 = vst.msk [vmem:[%s11 + $0x100] sm:$0xff] %vm561, %v492
  %595 = vst.msk [vmem:[%s11 + $0x108] sm:$0xff] %vm561, %v495
  %596 = vst.msk [vmem:[%s11 + $0x110] sm:$0xff] %vm561, %v500
  %597 = vst.msk [vmem:[%s11 + $0x118] sm:$0xff] %vm561, %v503
  %598 = vst.msk [vmem:[%s11 + $0x120] sm:$0xff] %vm561, %v508
  %599 = vst.msk [vmem:[%s11 + $0x128] sm:$0xff] %vm561, %v511
  %600 = vst.msk [vmem:[%s11 + $0x130] sm:$0xff] %vm561, %v516
  %601 = vst.msk [vmem:[%s11 + $0x138] sm:$0xff] %vm561, %v519
  %602 = vst.msk [vmem:[%s11 + $0x140] sm:$0xff] %vm561, %v524
  %603 = vst.msk [vmem:[%s11 + $0x148] sm:$0xff] %vm561, %v527
  %604 = vst.msk [vmem:[%s11 + $0x150] sm:$0xff] %vm561, %v532
  %605 = vst.msk [vmem:[%s11 + $0x158] sm:$0xff] %vm561, %v535
  %606 = vst.msk [vmem:[%s11 + $0x160] sm:$0xff] %vm561, %v540
  %607 = vst.msk [vmem:[%s11 + $0x168] sm:$0xff] %vm561, %v543
  %608 = vst.msk [vmem:[%s11 + $0x170] sm:$0xff] %vm561, %v548
  %609 = vst.msk [vmem:[%s11 + $0x178] sm:$0xff] %vm561, %v551
  %610 = vst.msk [vmem:[%s11 + $0x180] sm:$0xff] %vm561, %v556
  %v611 = vld [vmem:[%s5] sm:$0xff]
  %v612 = vld [vmem:[%s5 + $0x8] sm:$0xff]
  %v613 = vld [vmem:[%s5 + $0x10] sm:$0xff]
  %v614 = vld [vmem:[%s5 + $0x18] sm:$0xff]
  %v615 = vld [vmem:[%s5 + $0x20] sm:$0xff]
  %v616 = vld [vmem:[%s5 + $0x28] sm:$0xff]
  %v617 = vld [vmem:[%s5 + $0x30] sm:$0xff]
  %v618 = vld [vmem:[%s5 + $0x38] sm:$0xff]
  %v619 = vld [vmem:[%s5 + $0x40] sm:$0xff]
  %v620 = vld [vmem:[%s5 + $0x48] sm:$0xff]
  %v621 = vld [vmem:[%s5 + $0x50] sm:$0xff]
  %v622 = vld [vmem:[%s5 + $0x58] sm:$0xff]
  %v623 = vld [vmem:[%s5 + $0x60] sm:$0xff]
  %v624 = vld [vmem:[%s5 + $0x68] sm:$0xff]
  %v625 = vld [vmem:[%s5 + $0x70] sm:$0xff]
  %v626 = vld [vmem:[%s5 + $0x78] sm:$0xff]
  %v627 = vld [vmem:[%s5 + $0x80] sm:$0xff]
  %v628 = vld [vmem:[%s5 + $0x88] sm:$0xff]
  %v629 = vld [vmem:[%s5 + $0x90] sm:$0xff]
  %v630 = vld [vmem:[%s5 + $0x98] sm:$0xff]
  %v631 = vld [vmem:[%s5 + $0xa0] sm:$0xff]
  %v632 = vld [vmem:[%s5 + $0xa8] sm:$0xff]
  %v633 = vld [vmem:[%s5 + $0xb0] sm:$0xff]
  %v634 = vld [vmem:[%s5 + $0xb8] sm:$0xff]
  %v635 = vld [vmem:[%s5 + $0xc0] sm:$0xff]
  %v636 = vld [vmem:[%s5 + $0xc8] sm:$0xff]
  %v637 = vld [vmem:[%s5 + $0xd0] sm:$0xff]
  %v638 = vld [vmem:[%s5 + $0xd8] sm:$0xff]
  %v639 = vld [vmem:[%s5 + $0xe0] sm:$0xff]
  %v640 = vld [vmem:[%s5 + $0xe8] sm:$0xff]
  %v641 = vld [vmem:[%s5 + $0xf0] sm:$0xff]
  %v642 = vld [vmem:[%s5 + $0xf8] sm:$0xff]
  %v643 = vld [vmem:[%s5 + $0x100] sm:$0xff]
  %v644 = vld [vmem:[%s5 + $0x108] sm:$0xff]
  %v645 = vld [vmem:[%s5 + $0x110] sm:$0xff]
  %v646 = vld [vmem:[%s5 + $0x118] sm:$0xff]
  %v647 = vld [vmem:[%s5 + $0x120] sm:$0xff]
  %v648 = vld [vmem:[%s5 + $0x128] sm:$0xff]
  %v649 = vld [vmem:[%s5 + $0x130] sm:$0xff]
  %v650 = vld [vmem:[%s5 + $0x138] sm:$0xff]
  %v651 = vld [vmem:[%s5 + $0x140] sm:$0xff]
  %v652 = vld [vmem:[%s5 + $0x148] sm:$0xff]
  %v653 = vld [vmem:[%s5 + $0x150] sm:$0xff]
  %v654 = vld [vmem:[%s5 + $0x158] sm:$0xff]
  %v655 = vld [vmem:[%s5 + $0x160] sm:$0xff]
  %v656 = vld [vmem:[%s5 + $0x168] sm:$0xff]
  %v657 = vld [vmem:[%s5 + $0x170] sm:$0xff]
  %v658 = vld [vmem:[%s5 + $0x178] sm:$0xff]
  %v659 = vld [vmem:[%s5 + $0x180] sm:$0xff]
  %661 = vset.pattern.permute.xlu0 0
  %662 = vperm.xlu0 %661, %v611
  %v663 = vpop.permute.xlu0 %662
  %666 = vset.pattern.permute.xlu0 0
  %667 = vperm.xlu0 %666, %v612
  %v668 = vpop.permute.xlu0 %667
  %671 = vset.pattern.permute.xlu0 0
  %672 = vperm.xlu0 %671, %v613
  %v673 = vpop.permute.xlu0 %672
  %676 = vset.pattern.permute.xlu0 0
  %677 = vperm.xlu0 %676, %v614
  %v678 = vpop.permute.xlu0 %677
  %681 = vset.pattern.permute.xlu0 0
  %682 = vperm.xlu0 %681, %v615
  %v683 = vpop.permute.xlu0 %682
  %686 = vset.pattern.permute.xlu0 0
  %687 = vperm.xlu0 %686, %v616
  %v688 = vpop.permute.xlu0 %687
  %691 = vset.pattern.permute.xlu0 0
  %692 = vperm.xlu0 %691, %v617
  %v693 = vpop.permute.xlu0 %692
  %696 = vset.pattern.permute.xlu0 0
  %697 = vperm.xlu0 %696, %v618
  %v698 = vpop.permute.xlu0 %697
  %701 = vset.pattern.permute.xlu0 0
  %702 = vperm.xlu0 %701, %v619
  %v703 = vpop.permute.xlu0 %702
  %706 = vset.pattern.permute.xlu0 0
  %707 = vperm.xlu0 %706, %v620
  %v708 = vpop.permute.xlu0 %707
  %711 = vset.pattern.permute.xlu0 0
  %712 = vperm.xlu0 %711, %v621
  %v713 = vpop.permute.xlu0 %712
  %716 = vset.pattern.permute.xlu0 0
  %717 = vperm.xlu0 %716, %v622
  %v718 = vpop.permute.xlu0 %717
  %721 = vset.pattern.permute.xlu0 0
  %722 = vperm.xlu0 %721, %v623
  %v723 = vpop.permute.xlu0 %722
  %726 = vset.pattern.permute.xlu0 0
  %727 = vperm.xlu0 %726, %v624
  %v728 = vpop.permute.xlu0 %727
  %731 = vset.pattern.permute.xlu0 0
  %732 = vperm.xlu0 %731, %v625
  %v733 = vpop.permute.xlu0 %732
  %736 = vset.pattern.permute.xlu0 0
  %737 = vperm.xlu0 %736, %v626
  %v738 = vpop.permute.xlu0 %737
  %741 = vset.pattern.permute.xlu0 0
  %742 = vperm.xlu0 %741, %v627
  %v743 = vpop.permute.xlu0 %742
  %746 = vset.pattern.permute.xlu0 0
  %747 = vperm.xlu0 %746, %v628
  %v748 = vpop.permute.xlu0 %747
  %751 = vset.pattern.permute.xlu0 0
  %752 = vperm.xlu0 %751, %v629
  %v753 = vpop.permute.xlu0 %752
  %756 = vset.pattern.permute.xlu0 0
  %757 = vperm.xlu0 %756, %v630
  %v758 = vpop.permute.xlu0 %757
  %761 = vset.pattern.permute.xlu0 0
  %762 = vperm.xlu0 %761, %v631
  %v763 = vpop.permute.xlu0 %762
  %766 = vset.pattern.permute.xlu0 0
  %767 = vperm.xlu0 %766, %v632
  %v768 = vpop.permute.xlu0 %767
  %771 = vset.pattern.permute.xlu0 0
  %772 = vperm.xlu0 %771, %v633
  %v773 = vpop.permute.xlu0 %772
  %776 = vset.pattern.permute.xlu0 0
  %777 = vperm.xlu0 %776, %v634
  %v778 = vpop.permute.xlu0 %777
  %781 = vset.pattern.permute.xlu0 0
  %782 = vperm.xlu0 %781, %v635
  %v783 = vpop.permute.xlu0 %782
  %786 = vset.pattern.permute.xlu0 0
  %787 = vperm.xlu0 %786, %v636
  %v788 = vpop.permute.xlu0 %787
  %791 = vset.pattern.permute.xlu0 0
  %792 = vperm.xlu0 %791, %v637
  %v793 = vpop.permute.xlu0 %792
  %796 = vset.pattern.permute.xlu0 0
  %797 = vperm.xlu0 %796, %v638
  %v798 = vpop.permute.xlu0 %797
  %801 = vset.pattern.permute.xlu0 0
  %802 = vperm.xlu0 %801, %v639
  %v803 = vpop.permute.xlu0 %802
  %806 = vset.pattern.permute.xlu0 0
  %807 = vperm.xlu0 %806, %v640
  %v808 = vpop.permute.xlu0 %807
  %811 = vset.pattern.permute.xlu0 0
  %812 = vperm.xlu0 %811, %v641
  %v813 = vpop.permute.xlu0 %812
  %816 = vset.pattern.permute.xlu0 0
  %817 = vperm.xlu0 %816, %v642
  %v818 = vpop.permute.xlu0 %817
  %821 = vset.pattern.permute.xlu0 0
  %822 = vperm.xlu0 %821, %v643
  %v823 = vpop.permute.xlu0 %822
  %826 = vset.pattern.permute.xlu0 0
  %827 = vperm.xlu0 %826, %v644
  %v828 = vpop.permute.xlu0 %827
  %831 = vset.pattern.permute.xlu0 0
  %832 = vperm.xlu0 %831, %v645
  %v833 = vpop.permute.xlu0 %832
  %836 = vset.pattern.permute.xlu0 0
  %837 = vperm.xlu0 %836, %v646
  %v838 = vpop.permute.xlu0 %837
  %841 = vset.pattern.permute.xlu0 0
  %842 = vperm.xlu0 %841, %v647
  %v843 = vpop.permute.xlu0 %842
  %846 = vset.pattern.permute.xlu0 0
  %847 = vperm.xlu0 %846, %v648
  %v848 = vpop.permute.xlu0 %847
  %851 = vset.pattern.permute.xlu0 0
  %852 = vperm.xlu0 %851, %v649
  %v853 = vpop.permute.xlu0 %852
  %856 = vset.pattern.permute.xlu0 0
  %857 = vperm.xlu0 %856, %v650
  %v858 = vpop.permute.xlu0 %857
  %861 = vset.pattern.permute.xlu0 0
  %862 = vperm.xlu0 %861, %v651
  %v863 = vpop.permute.xlu0 %862
  %866 = vset.pattern.permute.xlu0 0
  %867 = vperm.xlu0 %866, %v652
  %v868 = vpop.permute.xlu0 %867
  %871 = vset.pattern.permute.xlu0 0
  %872 = vperm.xlu0 %871, %v653
  %v873 = vpop.permute.xlu0 %872
  %876 = vset.pattern.permute.xlu0 0
  %877 = vperm.xlu0 %876, %v654
  %v878 = vpop.permute.xlu0 %877
  %881 = vset.pattern.permute.xlu0 0
  %882 = vperm.xlu0 %881, %v655
  %v883 = vpop.permute.xlu0 %882
  %886 = vset.pattern.permute.xlu0 0
  %887 = vperm.xlu0 %886, %v656
  %v888 = vpop.permute.xlu0 %887
  %891 = vset.pattern.permute.xlu0 0
  %892 = vperm.xlu0 %891, %v657
  %v893 = vpop.permute.xlu0 %892
  %896 = vset.pattern.permute.xlu0 0
  %897 = vperm.xlu0 %896, %v658
  %v898 = vpop.permute.xlu0 %897
  %901 = vset.pattern.permute.xlu0 0
  %902 = vperm.xlu0 %901, %v659
  %v903 = vpop.permute.xlu0 %902
  %v905 = vmul.f32 %v364, %v663
  %v906 = vmul.f32 %v367, %v668
  %v907 = vmul.f32 %v372, %v673
  %v908 = vmul.f32 %v375, %v678
  %v909 = vmul.f32 %v380, %v683
  %v910 = vmul.f32 %v383, %v688
  %v911 = vmul.f32 %v388, %v693
  %v912 = vmul.f32 %v391, %v698
  %v913 = vmul.f32 %v396, %v703
  %v914 = vmul.f32 %v399, %v708
  %v915 = vmul.f32 %v404, %v713
  %v916 = vmul.f32 %v407, %v718
  %v917 = vmul.f32 %v412, %v723
  %v918 = vmul.f32 %v415, %v728
  %v919 = vmul.f32 %v420, %v733
  %v920 = vmul.f32 %v423, %v738
  %v921 = vmul.f32 %v428, %v743
  %v922 = vmul.f32 %v431, %v748
  %v923 = vmul.f32 %v436, %v753
  %v924 = vmul.f32 %v439, %v758
  %v925 = vmul.f32 %v444, %v763
  %v926 = vmul.f32 %v447, %v768
  %v927 = vmul.f32 %v452, %v773
  %v928 = vmul.f32 %v455, %v778
  %v929 = vmul.f32 %v460, %v783
  %v930 = vmul.f32 %v463, %v788
  %v931 = vmul.f32 %v468, %v793
  %v932 = vmul.f32 %v471, %v798
  %v933 = vmul.f32 %v476, %v803
  %v934 = vmul.f32 %v479, %v808
  %v935 = vmul.f32 %v484, %v813
  %v936 = vmul.f32 %v487, %v818
  %v937 = vmul.f32 %v492, %v823
  %v938 = vmul.f32 %v495, %v828
  %v939 = vmul.f32 %v500, %v833
  %v940 = vmul.f32 %v503, %v838
  %v941 = vmul.f32 %v508, %v843
  %v942 = vmul.f32 %v511, %v848
  %v943 = vmul.f32 %v516, %v853
  %v944 = vmul.f32 %v519, %v858
  %v945 = vmul.f32 %v524, %v863
  %v946 = vmul.f32 %v527, %v868
  %v947 = vmul.f32 %v532, %v873
  %v948 = vmul.f32 %v535, %v878
  %v949 = vmul.f32 %v540, %v883
  %v950 = vmul.f32 %v543, %v888
  %v951 = vmul.f32 %v548, %v893
  %v952 = vmul.f32 %v551, %v898
  %v953 = vmul.f32 %v556, %v903
  %v954 = vsel %vm561, %v905, 0.0
  %v955 = vsel %vm561, %v906, 0.0
  %v956 = vadd.f32 %v954, %v955
  %v957 = vsel %vm561, %v907, 0.0
  %v958 = vadd.f32 %v956, %v957
  %v959 = vsel %vm561, %v908, 0.0
  %v960 = vadd.f32 %v958, %v959
  %v961 = vsel %vm561, %v909, 0.0
  %v962 = vadd.f32 %v960, %v961
  %v963 = vsel %vm561, %v910, 0.0
  %v964 = vadd.f32 %v962, %v963
  %v965 = vsel %vm561, %v911, 0.0
  %v966 = vadd.f32 %v964, %v965
  %v967 = vsel %vm561, %v912, 0.0
  %v968 = vadd.f32 %v966, %v967
  %v969 = vsel %vm561, %v913, 0.0
  %v970 = vadd.f32 %v968, %v969
  %v971 = vsel %vm561, %v914, 0.0
  %v972 = vadd.f32 %v970, %v971
  %v973 = vsel %vm561, %v915, 0.0
  %v974 = vadd.f32 %v972, %v973
  %v975 = vsel %vm561, %v916, 0.0
  %v976 = vadd.f32 %v974, %v975
  %v977 = vsel %vm561, %v917, 0.0
  %v978 = vadd.f32 %v976, %v977
  %v979 = vsel %vm561, %v918, 0.0
  %v980 = vadd.f32 %v978, %v979
  %v981 = vsel %vm561, %v919, 0.0
  %v982 = vadd.f32 %v980, %v981
  %v983 = vsel %vm561, %v920, 0.0
  %v984 = vadd.f32 %v982, %v983
  %v985 = vsel %vm561, %v921, 0.0
  %v986 = vadd.f32 %v984, %v985
  %v987 = vsel %vm561, %v922, 0.0
  %v988 = vadd.f32 %v986, %v987
  %v989 = vsel %vm561, %v923, 0.0
  %v990 = vadd.f32 %v988, %v989
  %v991 = vsel %vm561, %v924, 0.0
  %v992 = vadd.f32 %v990, %v991
  %v993 = vsel %vm561, %v925, 0.0
  %v994 = vadd.f32 %v992, %v993
  %v995 = vsel %vm561, %v926, 0.0
  %v996 = vadd.f32 %v994, %v995
  %v997 = vsel %vm561, %v927, 0.0
  %v998 = vadd.f32 %v996, %v997
  %v999 = vsel %vm561, %v928, 0.0
  %v1000 = vadd.f32 %v998, %v999
  %v1001 = vsel %vm561, %v929, 0.0
  %v1002 = vadd.f32 %v1000, %v1001
  %v1003 = vsel %vm561, %v930, 0.0
  %v1004 = vadd.f32 %v1002, %v1003
  %v1005 = vsel %vm561, %v931, 0.0
  %v1006 = vadd.f32 %v1004, %v1005
  %v1007 = vsel %vm561, %v932, 0.0
  %v1008 = vadd.f32 %v1006, %v1007
  %v1009 = vsel %vm561, %v933, 0.0
  %v1010 = vadd.f32 %v1008, %v1009
  %v1011 = vsel %vm561, %v934, 0.0
  %v1012 = vadd.f32 %v1010, %v1011
  %v1013 = vsel %vm561, %v935, 0.0
  %v1014 = vadd.f32 %v1012, %v1013
  %v1015 = vsel %vm561, %v936, 0.0
  %v1016 = vadd.f32 %v1014, %v1015
  %v1017 = vsel %vm561, %v937, 0.0
  %v1018 = vadd.f32 %v1016, %v1017
  %v1019 = vsel %vm561, %v938, 0.0
  %v1020 = vadd.f32 %v1018, %v1019
  %v1021 = vsel %vm561, %v939, 0.0
  %v1022 = vadd.f32 %v1020, %v1021
  %v1023 = vsel %vm561, %v940, 0.0
  %v1024 = vadd.f32 %v1022, %v1023
  %v1025 = vsel %vm561, %v941, 0.0
  %v1026 = vadd.f32 %v1024, %v1025
  %v1027 = vsel %vm561, %v942, 0.0
  %v1028 = vadd.f32 %v1026, %v1027
  %v1029 = vsel %vm561, %v943, 0.0
  %v1030 = vadd.f32 %v1028, %v1029
  %v1031 = vsel %vm561, %v944, 0.0
  %v1032 = vadd.f32 %v1030, %v1031
  %v1033 = vsel %vm561, %v945, 0.0
  %v1034 = vadd.f32 %v1032, %v1033
  %v1035 = vsel %vm561, %v946, 0.0
  %v1036 = vadd.f32 %v1034, %v1035
  %v1037 = vsel %vm561, %v947, 0.0
  %v1038 = vadd.f32 %v1036, %v1037
  %v1039 = vsel %vm561, %v948, 0.0
  %v1040 = vadd.f32 %v1038, %v1039
  %v1041 = vsel %vm561, %v949, 0.0
  %v1042 = vadd.f32 %v1040, %v1041
  %v1043 = vsel %vm561, %v950, 0.0
  %v1044 = vadd.f32 %v1042, %v1043
  %v1045 = vsel %vm561, %v951, 0.0
  %v1046 = vadd.f32 %v1044, %v1045
  %v1047 = vsel %vm561, %v952, 0.0
  %v1048 = vadd.f32 %v1046, %v1047
  %v1049 = vsel %vm561, %v953, 0.0
  %v1050 = vadd.f32 %v1048, %v1049
  %v1051 = vrot.slane %v1050, 4
  %v1052 = vadd.f32 %v1050, %v1051
  %v1053 = vrot.slane %v1052, 2
  %v1054 = vadd.f32 %v1052, %v1053
  %v1055 = vrot.slane %v1054, 1
  %v1056 = vadd.f32 %v1054, %v1055
  %v1057 = vmul.f32 %v1056, 0.0061728396
  %v1058 = vsub.f32 %v364, %v1057
  %v1059 = vsub.f32 %v367, %v1057
  %v1060 = vsub.f32 %v372, %v1057
  %v1061 = vsub.f32 %v375, %v1057
  %v1062 = vsub.f32 %v380, %v1057
  %v1063 = vsub.f32 %v383, %v1057
  %v1064 = vsub.f32 %v388, %v1057
  %v1065 = vsub.f32 %v391, %v1057
  %v1066 = vsub.f32 %v396, %v1057
  %v1067 = vsub.f32 %v399, %v1057
  %v1068 = vsub.f32 %v404, %v1057
  %v1069 = vsub.f32 %v407, %v1057
  %v1070 = vsub.f32 %v412, %v1057
  %v1071 = vsub.f32 %v415, %v1057
  %v1072 = vsub.f32 %v420, %v1057
  %v1073 = vsub.f32 %v423, %v1057
  %v1074 = vsub.f32 %v428, %v1057
  %v1075 = vsub.f32 %v431, %v1057
  %v1076 = vsub.f32 %v436, %v1057
  %v1077 = vsub.f32 %v439, %v1057
  %v1078 = vsub.f32 %v444, %v1057
  %v1079 = vsub.f32 %v447, %v1057
  %v1080 = vsub.f32 %v452, %v1057
  %v1081 = vsub.f32 %v455, %v1057
  %v1082 = vsub.f32 %v460, %v1057
  %v1083 = vsub.f32 %v463, %v1057
  %v1084 = vsub.f32 %v468, %v1057
  %v1085 = vsub.f32 %v471, %v1057
  %v1086 = vsub.f32 %v476, %v1057
  %v1087 = vsub.f32 %v479, %v1057
  %v1088 = vsub.f32 %v484, %v1057
  %v1089 = vsub.f32 %v487, %v1057
  %v1090 = vsub.f32 %v492, %v1057
  %v1091 = vsub.f32 %v495, %v1057
  %v1092 = vsub.f32 %v500, %v1057
  %v1093 = vsub.f32 %v503, %v1057
  %v1094 = vsub.f32 %v508, %v1057
  %v1095 = vsub.f32 %v511, %v1057
  %v1096 = vsub.f32 %v516, %v1057
  %v1097 = vsub.f32 %v519, %v1057
  %v1098 = vsub.f32 %v524, %v1057
  %v1099 = vsub.f32 %v527, %v1057
  %v1100 = vsub.f32 %v532, %v1057
  %v1101 = vsub.f32 %v535, %v1057
  %v1102 = vsub.f32 %v540, %v1057
  %v1103 = vsub.f32 %v543, %v1057
  %v1104 = vsub.f32 %v548, %v1057
  %v1105 = vsub.f32 %v551, %v1057
  %v1106 = vsub.f32 %v556, %v1057
  %v1107 = vmul.f32 %v1058, %v1058
  %v1108 = vmul.f32 %v1059, %v1059
  %v1109 = vmul.f32 %v1060, %v1060
  %v1110 = vmul.f32 %v1061, %v1061
  %v1111 = vmul.f32 %v1062, %v1062
  %v1112 = vmul.f32 %v1063, %v1063
  %v1113 = vmul.f32 %v1064, %v1064
  %v1114 = vmul.f32 %v1065, %v1065
  %v1115 = vmul.f32 %v1066, %v1066
  %v1116 = vmul.f32 %v1067, %v1067
  %v1117 = vmul.f32 %v1068, %v1068
  %v1118 = vmul.f32 %v1069, %v1069
  %v1119 = vmul.f32 %v1070, %v1070
  %v1120 = vmul.f32 %v1071, %v1071
  %v1121 = vmul.f32 %v1072, %v1072
  %v1122 = vmul.f32 %v1073, %v1073
  %v1123 = vmul.f32 %v1074, %v1074
  %v1124 = vmul.f32 %v1075, %v1075
  %v1125 = vmul.f32 %v1076, %v1076
  %v1126 = vmul.f32 %v1077, %v1077
  %v1127 = vmul.f32 %v1078, %v1078
  %v1128 = vmul.f32 %v1079, %v1079
  %v1129 = vmul.f32 %v1080, %v1080
  %v1130 = vmul.f32 %v1081, %v1081
  %v1131 = vmul.f32 %v1082, %v1082
  %v1132 = vmul.f32 %v1083, %v1083
  %v1133 = vmul.f32 %v1084, %v1084
  %v1134 = vmul.f32 %v1085, %v1085
  %v1135 = vmul.f32 %v1086, %v1086
  %v1136 = vmul.f32 %v1087, %v1087
  %v1137 = vmul.f32 %v1088, %v1088
  %v1138 = vmul.f32 %v1089, %v1089
  %v1139 = vmul.f32 %v1090, %v1090
  %v1140 = vmul.f32 %v1091, %v1091
  %v1141 = vmul.f32 %v1092, %v1092
  %v1142 = vmul.f32 %v1093, %v1093
  %v1143 = vmul.f32 %v1094, %v1094
  %v1144 = vmul.f32 %v1095, %v1095
  %v1145 = vmul.f32 %v1096, %v1096
  %v1146 = vmul.f32 %v1097, %v1097
  %v1147 = vmul.f32 %v1098, %v1098
  %v1148 = vmul.f32 %v1099, %v1099
  %v1149 = vmul.f32 %v1100, %v1100
  %v1150 = vmul.f32 %v1101, %v1101
  %v1151 = vmul.f32 %v1102, %v1102
  %v1152 = vmul.f32 %v1103, %v1103
  %v1153 = vmul.f32 %v1104, %v1104
  %v1154 = vmul.f32 %v1105, %v1105
  %v1155 = vmul.f32 %v1106, %v1106
  %v1156 = vmul.f32 %v1107, %v663
  %v1157 = vmul.f32 %v1108, %v668
  %v1158 = vmul.f32 %v1109, %v673
  %v1159 = vmul.f32 %v1110, %v678
  %v1160 = vmul.f32 %v1111, %v683
  %v1161 = vmul.f32 %v1112, %v688
  %v1162 = vmul.f32 %v1113, %v693
  %v1163 = vmul.f32 %v1114, %v698
  %v1164 = vmul.f32 %v1115, %v703
  %v1165 = vmul.f32 %v1116, %v708
  %v1166 = vmul.f32 %v1117, %v713
  %v1167 = vmul.f32 %v1118, %v718
  %v1168 = vmul.f32 %v1119, %v723
  %v1169 = vmul.f32 %v1120, %v728
  %v1170 = vmul.f32 %v1121, %v733
  %v1171 = vmul.f32 %v1122, %v738
  %v1172 = vmul.f32 %v1123, %v743
  %v1173 = vmul.f32 %v1124, %v748
  %v1174 = vmul.f32 %v1125, %v753
  %v1175 = vmul.f32 %v1126, %v758
  %v1176 = vmul.f32 %v1127, %v763
  %v1177 = vmul.f32 %v1128, %v768
  %v1178 = vmul.f32 %v1129, %v773
  %v1179 = vmul.f32 %v1130, %v778
  %v1180 = vmul.f32 %v1131, %v783
  %v1181 = vmul.f32 %v1132, %v788
  %v1182 = vmul.f32 %v1133, %v793
  %v1183 = vmul.f32 %v1134, %v798
  %v1184 = vmul.f32 %v1135, %v803
  %v1185 = vmul.f32 %v1136, %v808
  %v1186 = vmul.f32 %v1137, %v813
  %v1187 = vmul.f32 %v1138, %v818
  %v1188 = vmul.f32 %v1139, %v823
  %v1189 = vmul.f32 %v1140, %v828
  %v1190 = vmul.f32 %v1141, %v833
  %v1191 = vmul.f32 %v1142, %v838
  %v1192 = vmul.f32 %v1143, %v843
  %v1193 = vmul.f32 %v1144, %v848
  %v1194 = vmul.f32 %v1145, %v853
  %v1195 = vmul.f32 %v1146, %v858
  %v1196 = vmul.f32 %v1147, %v863
  %v1197 = vmul.f32 %v1148, %v868
  %v1198 = vmul.f32 %v1149, %v873
  %v1199 = vmul.f32 %v1150, %v878
  %v1200 = vmul.f32 %v1151, %v883
  %v1201 = vmul.f32 %v1152, %v888
  %v1202 = vmul.f32 %v1153, %v893
  %v1203 = vmul.f32 %v1154, %v898
  %v1204 = vmul.f32 %v1155, %v903
  %v1205 = vsel %vm561, %v1156, 0.0
  %v1206 = vsel %vm561, %v1157, 0.0
  %v1207 = vadd.f32 %v1205, %v1206
  %v1208 = vsel %vm561, %v1158, 0.0
  %v1209 = vadd.f32 %v1207, %v1208
  %v1210 = vsel %vm561, %v1159, 0.0
  %v1211 = vadd.f32 %v1209, %v1210
  %v1212 = vsel %vm561, %v1160, 0.0
  %v1213 = vadd.f32 %v1211, %v1212
  %v1214 = vsel %vm561, %v1161, 0.0
  %v1215 = vadd.f32 %v1213, %v1214
  %v1216 = vsel %vm561, %v1162, 0.0
  %v1217 = vadd.f32 %v1215, %v1216
  %v1218 = vsel %vm561, %v1163, 0.0
  %v1219 = vadd.f32 %v1217, %v1218
  %v1220 = vsel %vm561, %v1164, 0.0
  %v1221 = vadd.f32 %v1219, %v1220
  %v1222 = vsel %vm561, %v1165, 0.0
  %v1223 = vadd.f32 %v1221, %v1222
  %v1224 = vsel %vm561, %v1166, 0.0
  %v1225 = vadd.f32 %v1223, %v1224
  %v1226 = vsel %vm561, %v1167, 0.0
  %v1227 = vadd.f32 %v1225, %v1226
  %v1228 = vsel %vm561, %v1168, 0.0
  %v1229 = vadd.f32 %v1227, %v1228
  %v1230 = vsel %vm561, %v1169, 0.0
  %v1231 = vadd.f32 %v1229, %v1230
  %v1232 = vsel %vm561, %v1170, 0.0
  %v1233 = vadd.f32 %v1231, %v1232
  %v1234 = vsel %vm561, %v1171, 0.0
  %v1235 = vadd.f32 %v1233, %v1234
  %v1236 = vsel %vm561, %v1172, 0.0
  %v1237 = vadd.f32 %v1235, %v1236
  %v1238 = vsel %vm561, %v1173, 0.0
  %v1239 = vadd.f32 %v1237, %v1238
  %v1240 = vsel %vm561, %v1174, 0.0
  %v1241 = vadd.f32 %v1239, %v1240
  %v1242 = vsel %vm561, %v1175, 0.0
  %v1243 = vadd.f32 %v1241, %v1242
  %v1244 = vsel %vm561, %v1176, 0.0
  %v1245 = vadd.f32 %v1243, %v1244
  %v1246 = vsel %vm561, %v1177, 0.0
  %v1247 = vadd.f32 %v1245, %v1246
  %v1248 = vsel %vm561, %v1178, 0.0
  %v1249 = vadd.f32 %v1247, %v1248
  %v1250 = vsel %vm561, %v1179, 0.0
  %v1251 = vadd.f32 %v1249, %v1250
  %v1252 = vsel %vm561, %v1180, 0.0
  %v1253 = vadd.f32 %v1251, %v1252
  %v1254 = vsel %vm561, %v1181, 0.0
  %v1255 = vadd.f32 %v1253, %v1254
  %v1256 = vsel %vm561, %v1182, 0.0
  %v1257 = vadd.f32 %v1255, %v1256
  %v1258 = vsel %vm561, %v1183, 0.0
  %v1259 = vadd.f32 %v1257, %v1258
  %v1260 = vsel %vm561, %v1184, 0.0
  %v1261 = vadd.f32 %v1259, %v1260
  %v1262 = vsel %vm561, %v1185, 0.0
  %v1263 = vadd.f32 %v1261, %v1262
  %v1264 = vsel %vm561, %v1186, 0.0
  %v1265 = vadd.f32 %v1263, %v1264
  %v1266 = vsel %vm561, %v1187, 0.0
  %v1267 = vadd.f32 %v1265, %v1266
  %v1268 = vsel %vm561, %v1188, 0.0
  %v1269 = vadd.f32 %v1267, %v1268
  %v1270 = vsel %vm561, %v1189, 0.0
  %v1271 = vadd.f32 %v1269, %v1270
  %v1272 = vsel %vm561, %v1190, 0.0
  %v1273 = vadd.f32 %v1271, %v1272
  %v1274 = vsel %vm561, %v1191, 0.0
  %v1275 = vadd.f32 %v1273, %v1274
  %v1276 = vsel %vm561, %v1192, 0.0
  %v1277 = vadd.f32 %v1275, %v1276
  %v1278 = vsel %vm561, %v1193, 0.0
  %v1279 = vadd.f32 %v1277, %v1278
  %v1280 = vsel %vm561, %v1194, 0.0
  %v1281 = vadd.f32 %v1279, %v1280
  %v1282 = vsel %vm561, %v1195, 0.0
  %v1283 = vadd.f32 %v1281, %v1282
  %v1284 = vsel %vm561, %v1196, 0.0
  %v1285 = vadd.f32 %v1283, %v1284
  %v1286 = vsel %vm561, %v1197, 0.0
  %v1287 = vadd.f32 %v1285, %v1286
  %v1288 = vsel %vm561, %v1198, 0.0
  %v1289 = vadd.f32 %v1287, %v1288
  %v1290 = vsel %vm561, %v1199, 0.0
  %v1291 = vadd.f32 %v1289, %v1290
  %v1292 = vsel %vm561, %v1200, 0.0
  %v1293 = vadd.f32 %v1291, %v1292
  %v1294 = vsel %vm561, %v1201, 0.0
  %v1295 = vadd.f32 %v1293, %v1294
  %v1296 = vsel %vm561, %v1202, 0.0
  %v1297 = vadd.f32 %v1295, %v1296
  %v1298 = vsel %vm561, %v1203, 0.0
  %v1299 = vadd.f32 %v1297, %v1298
  %v1300 = vsel %vm561, %v1204, 0.0
  %v1301 = vadd.f32 %v1299, %v1300
  %v1302 = vrot.slane %v1301, 4
  %v1303 = vadd.f32 %v1301, %v1302
  %v1304 = vrot.slane %v1303, 2
  %v1305 = vadd.f32 %v1303, %v1304
  %v1306 = vrot.slane %v1305, 1
  %v1307 = vadd.f32 %v1305, %v1306
  %v1308 = vmul.f32 %v1307, 0.0061728396
  %v1309 = vadd.f32 %v1308, 1e-05
  %v1310 = vrsqrt.pop %v1309
  %v1311 = vld [vmem:[%s3] sm:$0x1]
  %v1312 = vmul.f32 %v1310, %v1311
  %v1313 = vlaneseq
  %v1314 = vshrl.u32 %v1313, 7
  %v1315 = vsub.s32 0, %v1314
  %v1316 = vrot.slane %v1312, %v1315
  %v1317 = vmul.f32 %v1058, %v1316
  %v1318 = vmul.f32 %v1059, %v1316
  %v1319 = vmul.f32 %v1060, %v1316
  %v1320 = vmul.f32 %v1061, %v1316
  %v1321 = vmul.f32 %v1062, %v1316
  %v1322 = vmul.f32 %v1063, %v1316
  %v1323 = vmul.f32 %v1064, %v1316
  %v1324 = vmul.f32 %v1065, %v1316
  %v1325 = vmul.f32 %v1066, %v1316
  %v1326 = vmul.f32 %v1067, %v1316
  %v1327 = vmul.f32 %v1068, %v1316
  %v1328 = vmul.f32 %v1070, %v1316
  %v1329 = vmul.f32 %v1071, %v1316
  %v1330 = vmul.f32 %v1072, %v1316
  %v1331 = vmul.f32 %v1073, %v1316
  %v1332 = vmul.f32 %v1074, %v1316
  %v1333 = vmul.f32 %v1075, %v1316
  %v1334 = vmul.f32 %v1076, %v1316
  %v1335 = vmul.f32 %v1077, %v1316
  %v1336 = vmul.f32 %v1078, %v1316
  %v1337 = vmul.f32 %v1079, %v1316
  %v1338 = vmul.f32 %v1080, %v1316
  %v1339 = vmul.f32 %v1082, %v1316
  %v1340 = vmul.f32 %v1083, %v1316
  %v1341 = vmul.f32 %v1084, %v1316
  %v1342 = vmul.f32 %v1085, %v1316
  %v1343 = vmul.f32 %v1086, %v1316
  %v1344 = vmul.f32 %v1087, %v1316
  %v1345 = vmul.f32 %v1088, %v1316
  %v1346 = vmul.f32 %v1089, %v1316
  %v1347 = vmul.f32 %v1090, %v1316
  %v1348 = vmul.f32 %v1091, %v1316
  %v1349 = vmul.f32 %v1092, %v1316
  %v1350 = vmul.f32 %v1093, %v1316
  %v1351 = vmul.f32 %v1094, %v1316
  %v1352 = vmul.f32 %v1095, %v1316
  %v1353 = vmul.f32 %v1096, %v1316
  %v1354 = vmul.f32 %v1097, %v1316
  %v1355 = vmul.f32 %v1098, %v1316
  %v1356 = vmul.f32 %v1099, %v1316
  %v1357 = vmul.f32 %v1100, %v1316
  %v1358 = vmul.f32 %v1101, %v1316
  %v1359 = vmul.f32 %v1102, %v1316
  %v1360 = vmul.f32 %v1103, %v1316
  %v1361 = vmul.f32 %v1104, %v1316
  %v1362 = vmul.f32 %v1105, %v1316
  %v1363 = vld [vmem:[%s4] sm:$0x1]
  %v1365 = vlaneseq
  %v1366 = vshrl.u32 %v1365, 7
  %v1367 = vsub.s32 0, %v1366
  %v1368 = vrot.slane %v1363, %v1367
  %v1370 = vadd.f32 %v1317, %v1368
  %v1371 = vadd.f32 %v1318, %v1368
  %v1372 = vadd.f32 %v1319, %v1368
  %v1373 = vadd.f32 %v1320, %v1368
  %v1374 = vadd.f32 %v1321, %v1368
  %v1375 = vadd.f32 %v1322, %v1368
  %v1376 = vadd.f32 %v1323, %v1368
  %v1377 = vadd.f32 %v1324, %v1368
  %v1378 = vadd.f32 %v1325, %v1368
  %v1379 = vadd.f32 %v1326, %v1368
  %v1380 = vadd.f32 %v1327, %v1368
  %v1381 = vadd.f32 %v1328, %v1368
  %v1382 = vadd.f32 %v1329, %v1368
  %v1383 = vadd.f32 %v1330, %v1368
  %v1384 = vadd.f32 %v1331, %v1368
  %v1385 = vadd.f32 %v1332, %v1368
  %v1386 = vadd.f32 %v1333, %v1368
  %v1387 = vadd.f32 %v1334, %v1368
  %v1388 = vadd.f32 %v1335, %v1368
  %v1389 = vadd.f32 %v1336, %v1368
  %v1390 = vadd.f32 %v1337, %v1368
  %v1391 = vadd.f32 %v1338, %v1368
  %v1392 = vadd.f32 %v1339, %v1368
  %v1393 = vadd.f32 %v1340, %v1368
  %v1394 = vadd.f32 %v1341, %v1368
  %v1395 = vadd.f32 %v1342, %v1368
  %v1396 = vadd.f32 %v1343, %v1368
  %v1397 = vadd.f32 %v1344, %v1368
  %v1398 = vadd.f32 %v1345, %v1368
  %v1399 = vadd.f32 %v1346, %v1368
  %v1400 = vadd.f32 %v1347, %v1368
  %v1401 = vadd.f32 %v1348, %v1368
  %v1402 = vadd.f32 %v1349, %v1368
  %v1403 = vadd.f32 %v1350, %v1368
  %v1404 = vadd.f32 %v1351, %v1368
  %v1405 = vadd.f32 %v1352, %v1368
  %v1406 = vadd.f32 %v1353, %v1368
  %v1407 = vadd.f32 %v1354, %v1368
  %v1408 = vadd.f32 %v1355, %v1368
  %v1409 = vadd.f32 %v1356, %v1368
  %v1410 = vadd.f32 %v1357, %v1368
  %v1411 = vadd.f32 %v1358, %v1368
  %v1412 = vadd.f32 %v1359, %v1368
  %v1413 = vadd.f32 %v1360, %v1368
  %v1414 = vadd.f32 %v1361, %v1368
  %v1415 = vadd.f32 %v1362, %v1368
  %vm1416 = vcmp.gt.f32.partialorder %v1370, 0.0
  %vm1417 = vcmp.gt.f32.partialorder %v1371, 0.0
  %vm1418 = vcmp.gt.f32.partialorder %v1372, 0.0
  %vm1419 = vcmp.gt.f32.partialorder %v1373, 0.0
  %vm1420 = vcmp.gt.f32.partialorder %v1374, 0.0
  %vm1421 = vcmp.gt.f32.partialorder %v1375, 0.0
  %vm1422 = vcmp.gt.f32.partialorder %v1376, 0.0
  %vm1423 = vcmp.gt.f32.partialorder %v1377, 0.0
  %vm1424 = vcmp.gt.f32.partialorder %v1378, 0.0
  %vm1425 = vcmp.gt.f32.partialorder %v1379, 0.0
  %vm1426 = vcmp.gt.f32.partialorder %v1380, 0.0
  %vm1427 = vcmp.gt.f32.partialorder %v1381, 0.0
  %vm1428 = vcmp.gt.f32.partialorder %v1382, 0.0
  %vm1429 = vcmp.gt.f32.partialorder %v1383, 0.0
  %vm1430 = vcmp.gt.f32.partialorder %v1384, 0.0
  %vm1431 = vcmp.gt.f32.partialorder %v1385, 0.0
  %vm1432 = vcmp.gt.f32.partialorder %v1386, 0.0
  %vm1433 = vcmp.gt.f32.partialorder %v1387, 0.0
  %vm1434 = vcmp.gt.f32.partialorder %v1388, 0.0
  %vm1435 = vcmp.gt.f32.partialorder %v1389, 0.0
  %vm1436 = vcmp.gt.f32.partialorder %v1390, 0.0
  %vm1437 = vcmp.gt.f32.partialorder %v1391, 0.0
  %vm1438 = vcmp.gt.f32.partialorder %v1392, 0.0
  %vm1439 = vcmp.gt.f32.partialorder %v1393, 0.0
  %vm1440 = vcmp.gt.f32.partialorder %v1394, 0.0
  %vm1441 = vcmp.gt.f32.partialorder %v1395, 0.0
  %vm1442 = vcmp.gt.f32.partialorder %v1396, 0.0
  %vm1443 = vcmp.gt.f32.partialorder %v1397, 0.0
  %vm1444 = vcmp.gt.f32.partialorder %v1398, 0.0
  %vm1445 = vcmp.gt.f32.partialorder %v1399, 0.0
  %vm1446 = vcmp.gt.f32.partialorder %v1400, 0.0
  %vm1447 = vcmp.gt.f32.partialorder %v1401, 0.0
  %vm1448 = vcmp.gt.f32.partialorder %v1402, 0.0
  %vm1449 = vcmp.gt.f32.partialorder %v1403, 0.0
  %vm1450 = vcmp.gt.f32.partialorder %v1404, 0.0
  %vm1451 = vcmp.gt.f32.partialorder %v1405, 0.0
  %vm1452 = vcmp.gt.f32.partialorder %v1406, 0.0
  %vm1453 = vcmp.gt.f32.partialorder %v1407, 0.0
  %vm1454 = vcmp.gt.f32.partialorder %v1408, 0.0
  %vm1455 = vcmp.gt.f32.partialorder %v1409, 0.0
  %vm1456 = vcmp.gt.f32.partialorder %v1410, 0.0
  %vm1457 = vcmp.gt.f32.partialorder %v1411, 0.0
  %vm1458 = vcmp.gt.f32.partialorder %v1412, 0.0
  %vm1459 = vcmp.gt.f32.partialorder %v1413, 0.0
  %vm1460 = vcmp.gt.f32.partialorder %v1414, 0.0
  %vm1461 = vcmp.gt.f32.partialorder %v1415, 0.0
  %v1462 = vmul.f32 %v1370, 0.2
  %v1463 = vmul.f32 %v1371, 0.2
  %v1464 = vmul.f32 %v1372, 0.2
  %v1465 = vmul.f32 %v1373, 0.2
  %v1466 = vmul.f32 %v1374, 0.2
  %v1467 = vmul.f32 %v1375, 0.2
  %v1468 = vmul.f32 %v1376, 0.2
  %v1469 = vmul.f32 %v1377, 0.2
  %v1470 = vmul.f32 %v1378, 0.2
  %v1471 = vmul.f32 %v1379, 0.2
  %v1472 = vmul.f32 %v1380, 0.2
  %v1473 = vmul.f32 %v1381, 0.2
  %v1474 = vmul.f32 %v1382, 0.2
  %v1475 = vmul.f32 %v1383, 0.2
  %v1476 = vmul.f32 %v1384, 0.2
  %v1477 = vmul.f32 %v1385, 0.2
  %v1478 = vmul.f32 %v1386, 0.2
  %v1479 = vmul.f32 %v1387, 0.2
  %v1480 = vmul.f32 %v1388, 0.2
  %v1481 = vmul.f32 %v1389, 0.2
  %v1482 = vmul.f32 %v1390, 0.2
  %v1483 = vmul.f32 %v1391, 0.2
  %v1484 = vmul.f32 %v1392, 0.2
  %v1485 = vmul.f32 %v1393, 0.2
  %v1486 = vmul.f32 %v1394, 0.2
  %v1487 = vmul.f32 %v1395, 0.2
  %v1488 = vmul.f32 %v1396, 0.2
  %v1489 = vmul.f32 %v1397, 0.2
  %v1490 = vmul.f32 %v1398, 0.2
  %v1491 = vmul.f32 %v1399, 0.2
  %v1492 = vmul.f32 %v1400, 0.2
  %v1493 = vmul.f32 %v1401, 0.2
  %v1494 = vmul.f32 %v1402, 0.2
  %v1495 = vmul.f32 %v1403, 0.2
  %v1496 = vmul.f32 %v1404, 0.2
  %v1497 = vmul.f32 %v1405, 0.2
  %v1498 = vmul.f32 %v1406, 0.2
  %v1499 = vmul.f32 %v1407, 0.2
  %v1500 = vmul.f32 %v1408, 0.2
  %v1501 = vmul.f32 %v1409, 0.2
  %v1502 = vmul.f32 %v1410, 0.2
  %v1503 = vmul.f32 %v1411, 0.2
  %v1504 = vmul.f32 %v1412, 0.2
  %v1505 = vmul.f32 %v1413, 0.2
  %v1506 = vmul.f32 %v1414, 0.2
  %v1507 = vmul.f32 %v1415, 0.2
  %v1508 = vsel %vm1416, %v1370, %v1462
  %v1509 = vsel %vm1417, %v1371, %v1463
  %v1510 = vsel %vm1418, %v1372, %v1464
  %v1511 = vsel %vm1419, %v1373, %v1465
  %v1512 = vsel %vm1420, %v1374, %v1466
  %v1513 = vsel %vm1421, %v1375, %v1467
  %v1514 = vsel %vm1422, %v1376, %v1468
  %v1515 = vsel %vm1423, %v1377, %v1469
  %v1516 = vsel %vm1424, %v1378, %v1470
  %v1517 = vsel %vm1425, %v1379, %v1471
  %v1518 = vsel %vm1426, %v1380, %v1472
  %v1519 = vsel %vm1427, %v1381, %v1473
  %v1520 = vsel %vm1428, %v1382, %v1474
  %v1521 = vsel %vm1429, %v1383, %v1475
  %v1522 = vsel %vm1430, %v1384, %v1476
  %v1523 = vsel %vm1431, %v1385, %v1477
  %v1524 = vsel %vm1432, %v1386, %v1478
  %v1525 = vsel %vm1433, %v1387, %v1479
  %v1526 = vsel %vm1434, %v1388, %v1480
  %v1527 = vsel %vm1435, %v1389, %v1481
  %v1528 = vsel %vm1436, %v1390, %v1482
  %v1529 = vsel %vm1437, %v1391, %v1483
  %v1530 = vsel %vm1438, %v1392, %v1484
  %v1531 = vsel %vm1439, %v1393, %v1485
  %v1532 = vsel %vm1440, %v1394, %v1486
  %v1533 = vsel %vm1441, %v1395, %v1487
  %v1534 = vsel %vm1442, %v1396, %v1488
  %v1535 = vsel %vm1443, %v1397, %v1489
  %v1536 = vsel %vm1444, %v1398, %v1490
  %v1537 = vsel %vm1445, %v1399, %v1491
  %v1538 = vsel %vm1446, %v1400, %v1492
  %v1539 = vsel %vm1447, %v1401, %v1493
  %v1540 = vsel %vm1448, %v1402, %v1494
  %v1541 = vsel %vm1449, %v1403, %v1495
  %v1542 = vsel %vm1450, %v1404, %v1496
  %v1543 = vsel %vm1451, %v1405, %v1497
  %v1544 = vsel %vm1452, %v1406, %v1498
  %v1545 = vsel %vm1453, %v1407, %v1499
  %v1546 = vsel %vm1454, %v1408, %v1500
  %v1547 = vsel %vm1455, %v1409, %v1501
  %v1548 = vsel %vm1456, %v1410, %v1502
  %v1549 = vsel %vm1457, %v1411, %v1503
  %v1550 = vsel %vm1458, %v1412, %v1504
  %v1551 = vsel %vm1459, %v1413, %v1505
  %v1552 = vsel %vm1460, %v1414, %v1506
  %v1553 = vsel %vm1461, %v1415, %v1507
  %v1554 = vmul.f32 %v1508, %v663
  %v1555 = vmul.f32 %v1509, %v668
  %v1556 = vmul.f32 %v1510, %v673
  %v1557 = vmul.f32 %v1511, %v678
  %v1558 = vmul.f32 %v1512, %v683
  %v1559 = vmul.f32 %v1513, %v688
  %v1560 = vmul.f32 %v1514, %v693
  %v1561 = vmul.f32 %v1515, %v698
  %v1562 = vmul.f32 %v1516, %v703
  %v1563 = vmul.f32 %v1517, %v708
  %v1564 = vmul.f32 %v1518, %v713
  %v1565 = vmul.f32 %v1519, %v723
  %v1566 = vmul.f32 %v1520, %v728
  %v1567 = vmul.f32 %v1521, %v733
  %v1568 = vmul.f32 %v1522, %v738
  %v1569 = vmul.f32 %v1523, %v743
  %v1570 = vmul.f32 %v1524, %v748
  %v1571 = vmul.f32 %v1525, %v753
  %v1572 = vmul.f32 %v1526, %v758
  %v1573 = vmul.f32 %v1527, %v763
  %v1574 = vmul.f32 %v1528, %v768
  %v1575 = vmul.f32 %v1529, %v773
  %v1576 = vmul.f32 %v1530, %v783
  %v1577 = vmul.f32 %v1531, %v788
  %v1578 = vmul.f32 %v1532, %v793
  %v1579 = vmul.f32 %v1533, %v798
  %v1580 = vmul.f32 %v1534, %v803
  %v1581 = vmul.f32 %v1535, %v808
  %v1582 = vmul.f32 %v1536, %v813
  %v1583 = vmul.f32 %v1537, %v818
  %v1584 = vmul.f32 %v1538, %v823
  %v1585 = vmul.f32 %v1539, %v828
  %v1586 = vmul.f32 %v1540, %v833
  %v1587 = vmul.f32 %v1541, %v838
  %v1588 = vmul.f32 %v1542, %v843
  %v1589 = vmul.f32 %v1543, %v848
  %v1590 = vmul.f32 %v1544, %v853
  %v1591 = vmul.f32 %v1545, %v858
  %v1592 = vmul.f32 %v1546, %v863
  %v1593 = vmul.f32 %v1547, %v868
  %v1594 = vmul.f32 %v1548, %v873
  %v1595 = vmul.f32 %v1549, %v878
  %v1596 = vmul.f32 %v1550, %v883
  %v1597 = vmul.f32 %v1551, %v888
  %v1598 = vmul.f32 %v1552, %v893
  %v1599 = vmul.f32 %v1553, %v898
  %vm1609 = vcmask 1045504
  %v1610 = vrot.slane %v1565, 2
  %v1611 = vrot.slane %v1566, 2
  %v1612 = vsel %vm1609, %v1610, %v1611
  %v1613 = vrot.slane %v1567, 2
  %v1614 = vsel %vm1609, %v1611, %v1613
  %v1615 = vrot.slane %v1568, 2
  %v1616 = vsel %vm1609, %v1613, %v1615
  %v1617 = vrot.slane %v1569, 2
  %v1618 = vsel %vm1609, %v1615, %v1617
  %v1619 = vrot.slane %v1570, 2
  %v1620 = vsel %vm1609, %v1617, %v1619
  %v1621 = vrot.slane %v1571, 2
  %v1622 = vsel %vm1609, %v1619, %v1621
  %v1623 = vrot.slane %v1572, 2
  %v1624 = vsel %vm1609, %v1621, %v1623
  %v1625 = vrot.slane %v1573, 2
  %v1626 = vsel %vm1609, %v1623, %v1625
  %1627 = vrot.lane.b32.xlu0 %v1612, 8
  %v1628 = vpop.permute.xlu0 %1627
  %1629 = vrot.lane.b32.xlu0 %v1614, 8
  %v1630 = vpop.permute.xlu0 %1629
  %1631 = vrot.lane.b32.xlu0 %v1616, 8
  %v1632 = vpop.permute.xlu0 %1631
  %1633 = vrot.lane.b32.xlu0 %v1618, 8
  %v1634 = vpop.permute.xlu0 %1633
  %1635 = vrot.lane.b32.xlu0 %v1620, 8
  %v1636 = vpop.permute.xlu0 %1635
  %1637 = vrot.lane.b32.xlu0 %v1622, 8
  %v1638 = vpop.permute.xlu0 %1637
  %1639 = vrot.lane.b32.xlu0 %v1624, 8
  %v1640 = vpop.permute.xlu0 %1639
  %1641 = vrot.lane.b32.xlu0 %v1626, 8
  %v1642 = vpop.permute.xlu0 %1641
  %1643 = vrot.lane.b32.xlu0 %v1625, 8
  %v1644 = vpop.permute.xlu0 %1643
  %vm1663 = vcmask 1046528
  %v1664 = vrot.slane %v1554, 1
  %v1665 = vrot.slane %v1555, 1
  %v1666 = vsel %vm1663, %v1664, %v1665
  %v1667 = vrot.slane %v1556, 1
  %v1668 = vsel %vm1663, %v1665, %v1667
  %v1669 = vrot.slane %v1557, 1
  %v1670 = vsel %vm1663, %v1667, %v1669
  %v1671 = vrot.slane %v1558, 1
  %v1672 = vsel %vm1663, %v1669, %v1671
  %v1673 = vrot.slane %v1559, 1
  %v1674 = vsel %vm1663, %v1671, %v1673
  %v1675 = vrot.slane %v1560, 1
  %v1676 = vsel %vm1663, %v1673, %v1675
  %v1677 = vrot.slane %v1561, 1
  %v1678 = vsel %vm1663, %v1675, %v1677
  %v1679 = vrot.slane %v1562, 1
  %v1680 = vsel %vm1663, %v1677, %v1679
  %1681 = vrot.lane.b32.xlu0 %v1666, 16
  %v1682 = vpop.permute.xlu0 %1681
  %1683 = vrot.lane.b32.xlu0 %v1668, 16
  %v1684 = vpop.permute.xlu0 %1683
  %1685 = vrot.lane.b32.xlu0 %v1670, 16
  %v1686 = vpop.permute.xlu0 %1685
  %1687 = vrot.lane.b32.xlu0 %v1672, 16
  %v1688 = vpop.permute.xlu0 %1687
  %1689 = vrot.lane.b32.xlu0 %v1674, 16
  %v1690 = vpop.permute.xlu0 %1689
  %1691 = vrot.lane.b32.xlu0 %v1676, 16
  %v1692 = vpop.permute.xlu0 %1691
  %1693 = vrot.lane.b32.xlu0 %v1678, 16
  %v1694 = vpop.permute.xlu0 %1693
  %1695 = vrot.lane.b32.xlu0 %v1680, 16
  %v1696 = vpop.permute.xlu0 %1695
  %1697 = vrot.lane.b32.xlu0 %v1679, 16
  %v1698 = vpop.permute.xlu0 %1697
  %vm1709 = vcmask 1044480
  %v1710 = vrot.slane %v1565, 3
  %v1711 = vrot.slane %v1566, 3
  %v1712 = vsel %vm1709, %v1710, %v1711
  %v1713 = vrot.slane %v1567, 3
  %v1714 = vsel %vm1709, %v1711, %v1713
  %v1715 = vrot.slane %v1568, 3
  %v1716 = vsel %vm1709, %v1713, %v1715
  %v1717 = vrot.slane %v1569, 3
  %v1718 = vsel %vm1709, %v1715, %v1717
  %v1719 = vrot.slane %v1570, 3
  %v1720 = vsel %vm1709, %v1717, %v1719
  %v1721 = vrot.slane %v1571, 3
  %v1722 = vsel %vm1709, %v1719, %v1721
  %v1723 = vrot.slane %v1572, 3
  %v1724 = vsel %vm1709, %v1721, %v1723
  %v1725 = vrot.slane %v1573, 3
  %v1726 = vsel %vm1709, %v1723, %v1725
  %v1727 = vrot.slane %v1574, 3
  %v1728 = vsel %vm1709, %v1725, %v1727
  %1729 = vrot.lane.b32.xlu0 %v1712, 24
  %v1730 = vpop.permute.xlu0 %1729
  %1731 = vrot.lane.b32.xlu0 %v1714, 24
  %v1732 = vpop.permute.xlu0 %1731
  %1733 = vrot.lane.b32.xlu0 %v1716, 24
  %v1734 = vpop.permute.xlu0 %1733
  %1735 = vrot.lane.b32.xlu0 %v1718, 24
  %v1736 = vpop.permute.xlu0 %1735
  %1737 = vrot.lane.b32.xlu0 %v1720, 24
  %v1738 = vpop.permute.xlu0 %1737
  %1739 = vrot.lane.b32.xlu0 %v1722, 24
  %v1740 = vpop.permute.xlu0 %1739
  %1741 = vrot.lane.b32.xlu0 %v1724, 24
  %v1742 = vpop.permute.xlu0 %1741
  %1743 = vrot.lane.b32.xlu0 %v1726, 24
  %v1744 = vpop.permute.xlu0 %1743
  %1745 = vrot.lane.b32.xlu0 %v1728, 24
  %v1746 = vpop.permute.xlu0 %1745
  %vm1766 = vcmask 1043456
  %v1767 = vrot.slane %v1576, 4
  %v1768 = vrot.slane %v1577, 4
  %v1769 = vsel %vm1766, %v1767, %v1768
  %v1770 = vrot.slane %v1578, 4
  %v1771 = vsel %vm1766, %v1768, %v1770
  %v1772 = vrot.slane %v1579, 4
  %v1773 = vsel %vm1766, %v1770, %v1772
  %v1774 = vrot.slane %v1580, 4
  %v1775 = vsel %vm1766, %v1772, %v1774
  %v1776 = vrot.slane %v1581, 4
  %v1777 = vsel %vm1766, %v1774, %v1776
  %v1778 = vrot.slane %v1582, 4
  %v1779 = vsel %vm1766, %v1776, %v1778
  %v1780 = vrot.slane %v1583, 4
  %v1781 = vsel %vm1766, %v1778, %v1780
  %v1782 = vrot.slane %v1584, 4
  %v1783 = vsel %vm1766, %v1780, %v1782
  %v1784 = vrot.slane %v1585, 4
  %v1785 = vsel %vm1766, %v1782, %v1784
  %1786 = vrot.lane.b32.xlu0 %v1769, 32
  %v1787 = vpop.permute.xlu0 %1786
  %1788 = vrot.lane.b32.xlu0 %v1771, 32
  %v1789 = vpop.permute.xlu0 %1788
  %1790 = vrot.lane.b32.xlu0 %v1773, 32
  %v1791 = vpop.permute.xlu0 %1790
  %1792 = vrot.lane.b32.xlu0 %v1775, 32
  %v1793 = vpop.permute.xlu0 %1792
  %1794 = vrot.lane.b32.xlu0 %v1777, 32
  %v1795 = vpop.permute.xlu0 %1794
  %1796 = vrot.lane.b32.xlu0 %v1779, 32
  %v1797 = vpop.permute.xlu0 %1796
  %1798 = vrot.lane.b32.xlu0 %v1781, 32
  %v1799 = vpop.permute.xlu0 %1798
  %1800 = vrot.lane.b32.xlu0 %v1783, 32
  %v1801 = vpop.permute.xlu0 %1800
  %1802 = vrot.lane.b32.xlu0 %v1785, 32
  %v1803 = vpop.permute.xlu0 %1802
  %vm1823 = vcmask 1041408
  %v1824 = vrot.slane %v1588, 6
  %v1825 = vrot.slane %v1589, 6
  %v1826 = vsel %vm1823, %v1824, %v1825
  %v1827 = vrot.slane %v1590, 6
  %v1828 = vsel %vm1823, %v1825, %v1827
  %v1829 = vrot.slane %v1591, 6
  %v1830 = vsel %vm1823, %v1827, %v1829
  %v1831 = vrot.slane %v1592, 6
  %v1832 = vsel %vm1823, %v1829, %v1831
  %v1833 = vrot.slane %v1593, 6
  %v1834 = vsel %vm1823, %v1831, %v1833
  %v1835 = vrot.slane %v1594, 6
  %v1836 = vsel %vm1823, %v1833, %v1835
  %v1837 = vrot.slane %v1595, 6
  %v1838 = vsel %vm1823, %v1835, %v1837
  %v1839 = vrot.slane %v1596, 6
  %v1840 = vsel %vm1823, %v1837, %v1839
  %v1841 = vrot.slane %v1597, 6
  %v1842 = vsel %vm1823, %v1839, %v1841
  %1843 = vrot.lane.b32.xlu0 %v1826, 40
  %v1844 = vpop.permute.xlu0 %1843
  %1845 = vrot.lane.b32.xlu0 %v1828, 40
  %v1846 = vpop.permute.xlu0 %1845
  %1847 = vrot.lane.b32.xlu0 %v1830, 40
  %v1848 = vpop.permute.xlu0 %1847
  %1849 = vrot.lane.b32.xlu0 %v1832, 40
  %v1850 = vpop.permute.xlu0 %1849
  %1851 = vrot.lane.b32.xlu0 %v1834, 40
  %v1852 = vpop.permute.xlu0 %1851
  %1853 = vrot.lane.b32.xlu0 %v1836, 40
  %v1854 = vpop.permute.xlu0 %1853
  %1855 = vrot.lane.b32.xlu0 %v1838, 40
  %v1856 = vpop.permute.xlu0 %1855
  %1857 = vrot.lane.b32.xlu0 %v1840, 40
  %v1858 = vpop.permute.xlu0 %1857
  %1859 = vrot.lane.b32.xlu0 %v1842, 40
  %v1860 = vpop.permute.xlu0 %1859
  %vm1870 = vcmask 1042432
  %v1871 = vrot.slane %v1576, 5
  %v1872 = vrot.slane %v1577, 5
  %v1873 = vsel %vm1870, %v1871, %v1872
  %v1874 = vrot.slane %v1578, 5
  %v1875 = vsel %vm1870, %v1872, %v1874
  %v1876 = vrot.slane %v1579, 5
  %v1877 = vsel %vm1870, %v1874, %v1876
  %v1878 = vrot.slane %v1580, 5
  %v1879 = vsel %vm1870, %v1876, %v1878
  %v1880 = vrot.slane %v1581, 5
  %v1881 = vsel %vm1870, %v1878, %v1880
  %v1882 = vrot.slane %v1582, 5
  %v1883 = vsel %vm1870, %v1880, %v1882
  %v1884 = vrot.slane %v1583, 5
  %v1885 = vsel %vm1870, %v1882, %v1884
  %v1886 = vrot.slane %v1584, 5
  %v1887 = vsel %vm1870, %v1884, %v1886
  %v1888 = vrot.slane %v1585, 5
  %v1889 = vsel %vm1870, %v1886, %v1888
  %1890 = vrot.lane.b32.xlu0 %v1873, 48
  %v1891 = vpop.permute.xlu0 %1890
  %1892 = vrot.lane.b32.xlu0 %v1875, 48
  %v1893 = vpop.permute.xlu0 %1892
  %1894 = vrot.lane.b32.xlu0 %v1877, 48
  %v1895 = vpop.permute.xlu0 %1894
  %1896 = vrot.lane.b32.xlu0 %v1879, 48
  %v1897 = vpop.permute.xlu0 %1896
  %1898 = vrot.lane.b32.xlu0 %v1881, 48
  %v1899 = vpop.permute.xlu0 %1898
  %1900 = vrot.lane.b32.xlu0 %v1883, 48
  %v1901 = vpop.permute.xlu0 %1900
  %1902 = vrot.lane.b32.xlu0 %v1885, 48
  %v1903 = vpop.permute.xlu0 %1902
  %1904 = vrot.lane.b32.xlu0 %v1887, 48
  %v1905 = vpop.permute.xlu0 %1904
  %1906 = vrot.lane.b32.xlu0 %v1889, 48
  %v1907 = vpop.permute.xlu0 %1906
  %vm1917 = vcmask 1040384
  %v1918 = vrot.slane %v1588, 7
  %v1919 = vrot.slane %v1589, 7
  %v1920 = vsel %vm1917, %v1918, %v1919
  %v1921 = vrot.slane %v1590, 7
  %v1922 = vsel %vm1917, %v1919, %v1921
  %v1923 = vrot.slane %v1591, 7
  %v1924 = vsel %vm1917, %v1921, %v1923
  %v1925 = vrot.slane %v1592, 7
  %v1926 = vsel %vm1917, %v1923, %v1925
  %v1927 = vrot.slane %v1593, 7
  %v1928 = vsel %vm1917, %v1925, %v1927
  %v1929 = vrot.slane %v1594, 7
  %v1930 = vsel %vm1917, %v1927, %v1929
  %v1931 = vrot.slane %v1595, 7
  %v1932 = vsel %vm1917, %v1929, %v1931
  %v1933 = vrot.slane %v1596, 7
  %v1934 = vsel %vm1917, %v1931, %v1933
  %v1935 = vrot.slane %v1597, 7
  %v1936 = vsel %vm1917, %v1933, %v1935
  %1937 = vrot.lane.b32.xlu0 %v1920, 56
  %v1938 = vpop.permute.xlu0 %1937
  %1939 = vrot.lane.b32.xlu0 %v1922, 56
  %v1940 = vpop.permute.xlu0 %1939
  %1941 = vrot.lane.b32.xlu0 %v1924, 56
  %v1942 = vpop.permute.xlu0 %1941
  %1943 = vrot.lane.b32.xlu0 %v1926, 56
  %v1944 = vpop.permute.xlu0 %1943
  %1945 = vrot.lane.b32.xlu0 %v1928, 56
  %v1946 = vpop.permute.xlu0 %1945
  %1947 = vrot.lane.b32.xlu0 %v1930, 56
  %v1948 = vpop.permute.xlu0 %1947
  %1949 = vrot.lane.b32.xlu0 %v1932, 56
  %v1950 = vpop.permute.xlu0 %1949
  %1951 = vrot.lane.b32.xlu0 %v1934, 56
  %v1952 = vpop.permute.xlu0 %1951
  %1953 = vrot.lane.b32.xlu0 %v1936, 56
  %v1954 = vpop.permute.xlu0 %1953
  %v1966 = vrot.slane %v1555, 6
  %v1967 = vrot.slane %v1556, 6
  %v1968 = vsel %vm1823, %v1966, %v1967
  %v1969 = vrot.slane %v1557, 6
  %v1970 = vsel %vm1823, %v1967, %v1969
  %v1971 = vrot.slane %v1558, 6
  %v1972 = vsel %vm1823, %v1969, %v1971
  %v1973 = vrot.slane %v1559, 6
  %v1974 = vsel %vm1823, %v1971, %v1973
  %v1975 = vrot.slane %v1560, 6
  %v1976 = vsel %vm1823, %v1973, %v1975
  %v1977 = vrot.slane %v1561, 6
  %v1978 = vsel %vm1823, %v1975, %v1977
  %v1979 = vrot.slane %v1562, 6
  %v1980 = vsel %vm1823, %v1977, %v1979
  %v1981 = vrot.slane %v1563, 6
  %v1982 = vsel %vm1823, %v1979, %v1981
  %v1983 = vrot.slane %v1564, 6
  %v1984 = vsel %vm1823, %v1981, %v1983
  %1985 = vrot.lane.b32.xlu0 %v1968, 64
  %v1986 = vpop.permute.xlu0 %1985
  %1987 = vrot.lane.b32.xlu0 %v1970, 64
  %v1988 = vpop.permute.xlu0 %1987
  %1989 = vrot.lane.b32.xlu0 %v1972, 64
  %v1990 = vpop.permute.xlu0 %1989
  %1991 = vrot.lane.b32.xlu0 %v1974, 64
  %v1992 = vpop.permute.xlu0 %1991
  %1993 = vrot.lane.b32.xlu0 %v1976, 64
  %v1994 = vpop.permute.xlu0 %1993
  %1995 = vrot.lane.b32.xlu0 %v1978, 64
  %v1996 = vpop.permute.xlu0 %1995
  %1997 = vrot.lane.b32.xlu0 %v1980, 64
  %v1998 = vpop.permute.xlu0 %1997
  %1999 = vrot.lane.b32.xlu0 %v1982, 64
  %v2000 = vpop.permute.xlu0 %1999
  %2001 = vrot.lane.b32.xlu0 %v1984, 64
  %v2002 = vpop.permute.xlu0 %2001
  %2013 = vrot.lane.b32.xlu0 %v1567, 72
  %v2014 = vpop.permute.xlu0 %2013
  %2015 = vrot.lane.b32.xlu0 %v1568, 72
  %v2016 = vpop.permute.xlu0 %2015
  %2017 = vrot.lane.b32.xlu0 %v1569, 72
  %v2018 = vpop.permute.xlu0 %2017
  %2019 = vrot.lane.b32.xlu0 %v1570, 72
  %v2020 = vpop.permute.xlu0 %2019
  %2021 = vrot.lane.b32.xlu0 %v1571, 72
  %v2022 = vpop.permute.xlu0 %2021
  %2023 = vrot.lane.b32.xlu0 %v1572, 72
  %v2024 = vpop.permute.xlu0 %2023
  %2025 = vrot.lane.b32.xlu0 %v1573, 72
  %v2026 = vpop.permute.xlu0 %2025
  %2027 = vrot.lane.b32.xlu0 %v1574, 72
  %v2028 = vpop.permute.xlu0 %2027
  %2029 = vrot.lane.b32.xlu0 %v1575, 72
  %v2030 = vpop.permute.xlu0 %2029
  %v2040 = vrot.slane %v1555, 7
  %v2041 = vrot.slane %v1556, 7
  %v2042 = vsel %vm1917, %v2040, %v2041
  %v2043 = vrot.slane %v1557, 7
  %v2044 = vsel %vm1917, %v2041, %v2043
  %v2045 = vrot.slane %v1558, 7
  %v2046 = vsel %vm1917, %v2043, %v2045
  %v2047 = vrot.slane %v1559, 7
  %v2048 = vsel %vm1917, %v2045, %v2047
  %v2049 = vrot.slane %v1560, 7
  %v2050 = vsel %vm1917, %v2047, %v2049
  %v2051 = vrot.slane %v1561, 7
  %v2052 = vsel %vm1917, %v2049, %v2051
  %v2053 = vrot.slane %v1562, 7
  %v2054 = vsel %vm1917, %v2051, %v2053
  %v2055 = vrot.slane %v1563, 7
  %v2056 = vsel %vm1917, %v2053, %v2055
  %v2057 = vrot.slane %v1564, 7
  %v2058 = vsel %vm1917, %v2055, %v2057
  %2059 = vrot.lane.b32.xlu0 %v2042, 80
  %v2060 = vpop.permute.xlu0 %2059
  %2061 = vrot.lane.b32.xlu0 %v2044, 80
  %v2062 = vpop.permute.xlu0 %2061
  %2063 = vrot.lane.b32.xlu0 %v2046, 80
  %v2064 = vpop.permute.xlu0 %2063
  %2065 = vrot.lane.b32.xlu0 %v2048, 80
  %v2066 = vpop.permute.xlu0 %2065
  %2067 = vrot.lane.b32.xlu0 %v2050, 80
  %v2068 = vpop.permute.xlu0 %2067
  %2069 = vrot.lane.b32.xlu0 %v2052, 80
  %v2070 = vpop.permute.xlu0 %2069
  %2071 = vrot.lane.b32.xlu0 %v2054, 80
  %v2072 = vpop.permute.xlu0 %2071
  %2073 = vrot.lane.b32.xlu0 %v2056, 80
  %v2074 = vpop.permute.xlu0 %2073
  %2075 = vrot.lane.b32.xlu0 %v2058, 80
  %v2076 = vpop.permute.xlu0 %2075
  %v2086 = vrot.slane %v1567, 1
  %v2087 = vrot.slane %v1568, 1
  %v2088 = vsel %vm1663, %v2086, %v2087
  %v2089 = vrot.slane %v1569, 1
  %v2090 = vsel %vm1663, %v2087, %v2089
  %v2091 = vrot.slane %v1570, 1
  %v2092 = vsel %vm1663, %v2089, %v2091
  %v2093 = vrot.slane %v1571, 1
  %v2094 = vsel %vm1663, %v2091, %v2093
  %v2095 = vrot.slane %v1572, 1
  %v2096 = vsel %vm1663, %v2093, %v2095
  %v2097 = vrot.slane %v1573, 1
  %v2098 = vsel %vm1663, %v2095, %v2097
  %v2099 = vrot.slane %v1574, 1
  %v2100 = vsel %vm1663, %v2097, %v2099
  %v2101 = vrot.slane %v1575, 1
  %v2102 = vsel %vm1663, %v2099, %v2101
  %2103 = vrot.lane.b32.xlu0 %v2088, 88
  %v2104 = vpop.permute.xlu0 %2103
  %2105 = vrot.lane.b32.xlu0 %v2090, 88
  %v2106 = vpop.permute.xlu0 %2105
  %2107 = vrot.lane.b32.xlu0 %v2092, 88
  %v2108 = vpop.permute.xlu0 %2107
  %2109 = vrot.lane.b32.xlu0 %v2094, 88
  %v2110 = vpop.permute.xlu0 %2109
  %2111 = vrot.lane.b32.xlu0 %v2096, 88
  %v2112 = vpop.permute.xlu0 %2111
  %2113 = vrot.lane.b32.xlu0 %v2098, 88
  %v2114 = vpop.permute.xlu0 %2113
  %2115 = vrot.lane.b32.xlu0 %v2100, 88
  %v2116 = vpop.permute.xlu0 %2115
  %2117 = vrot.lane.b32.xlu0 %v2102, 88
  %v2118 = vpop.permute.xlu0 %2117
  %2119 = vrot.lane.b32.xlu0 %v2101, 88
  %v2120 = vpop.permute.xlu0 %2119
  %v2131 = vrot.slane %v1578, 2
  %v2132 = vrot.slane %v1579, 2
  %v2133 = vsel %vm1609, %v2131, %v2132
  %v2134 = vrot.slane %v1580, 2
  %v2135 = vsel %vm1609, %v2132, %v2134
  %v2136 = vrot.slane %v1581, 2
  %v2137 = vsel %vm1609, %v2134, %v2136
  %v2138 = vrot.slane %v1582, 2
  %v2139 = vsel %vm1609, %v2136, %v2138
  %v2140 = vrot.slane %v1583, 2
  %v2141 = vsel %vm1609, %v2138, %v2140
  %v2142 = vrot.slane %v1584, 2
  %v2143 = vsel %vm1609, %v2140, %v2142
  %v2144 = vrot.slane %v1585, 2
  %v2145 = vsel %vm1609, %v2142, %v2144
  %v2146 = vrot.slane %v1586, 2
  %v2147 = vsel %vm1609, %v2144, %v2146
  %2148 = vrot.lane.b32.xlu0 %v2133, 96
  %v2149 = vpop.permute.xlu0 %2148
  %2150 = vrot.lane.b32.xlu0 %v2135, 96
  %v2151 = vpop.permute.xlu0 %2150
  %2152 = vrot.lane.b32.xlu0 %v2137, 96
  %v2153 = vpop.permute.xlu0 %2152
  %2154 = vrot.lane.b32.xlu0 %v2139, 96
  %v2155 = vpop.permute.xlu0 %2154
  %2156 = vrot.lane.b32.xlu0 %v2141, 96
  %v2157 = vpop.permute.xlu0 %2156
  %2158 = vrot.lane.b32.xlu0 %v2143, 96
  %v2159 = vpop.permute.xlu0 %2158
  %2160 = vrot.lane.b32.xlu0 %v2145, 96
  %v2161 = vpop.permute.xlu0 %2160
  %2162 = vrot.lane.b32.xlu0 %v2147, 96
  %v2163 = vpop.permute.xlu0 %2162
  %2164 = vrot.lane.b32.xlu0 %v2146, 96
  %v2165 = vpop.permute.xlu0 %2164
  %v2177 = vrot.slane %v1590, 4
  %v2178 = vrot.slane %v1591, 4
  %v2179 = vsel %vm1766, %v2177, %v2178
  %v2180 = vrot.slane %v1592, 4
  %v2181 = vsel %vm1766, %v2178, %v2180
  %v2182 = vrot.slane %v1593, 4
  %v2183 = vsel %vm1766, %v2180, %v2182
  %v2184 = vrot.slane %v1594, 4
  %v2185 = vsel %vm1766, %v2182, %v2184
  %v2186 = vrot.slane %v1595, 4
  %v2187 = vsel %vm1766, %v2184, %v2186
  %v2188 = vrot.slane %v1596, 4
  %v2189 = vsel %vm1766, %v2186, %v2188
  %v2190 = vrot.slane %v1597, 4
  %v2191 = vsel %vm1766, %v2188, %v2190
  %v2192 = vrot.slane %v1598, 4
  %v2193 = vsel %vm1766, %v2190, %v2192
  %v2194 = vrot.slane %v1599, 4
  %v2195 = vsel %vm1766, %v2192, %v2194
  %2196 = vrot.lane.b32.xlu0 %v2179, 104
  %v2197 = vpop.permute.xlu0 %2196
  %2198 = vrot.lane.b32.xlu0 %v2181, 104
  %v2199 = vpop.permute.xlu0 %2198
  %2200 = vrot.lane.b32.xlu0 %v2183, 104
  %v2201 = vpop.permute.xlu0 %2200
  %2202 = vrot.lane.b32.xlu0 %v2185, 104
  %v2203 = vpop.permute.xlu0 %2202
  %2204 = vrot.lane.b32.xlu0 %v2187, 104
  %v2205 = vpop.permute.xlu0 %2204
  %2206 = vrot.lane.b32.xlu0 %v2189, 104
  %v2207 = vpop.permute.xlu0 %2206
  %2208 = vrot.lane.b32.xlu0 %v2191, 104
  %v2209 = vpop.permute.xlu0 %2208
  %2210 = vrot.lane.b32.xlu0 %v2193, 104
  %v2211 = vpop.permute.xlu0 %2210
  %2212 = vrot.lane.b32.xlu0 %v2195, 104
  %v2213 = vpop.permute.xlu0 %2212
  %v2224 = vrot.slane %v1578, 3
  %v2225 = vrot.slane %v1579, 3
  %v2226 = vsel %vm1709, %v2224, %v2225
  %v2227 = vrot.slane %v1580, 3
  %v2228 = vsel %vm1709, %v2225, %v2227
  %v2229 = vrot.slane %v1581, 3
  %v2230 = vsel %vm1709, %v2227, %v2229
  %v2231 = vrot.slane %v1582, 3
  %v2232 = vsel %vm1709, %v2229, %v2231
  %v2233 = vrot.slane %v1583, 3
  %v2234 = vsel %vm1709, %v2231, %v2233
  %v2235 = vrot.slane %v1584, 3
  %v2236 = vsel %vm1709, %v2233, %v2235
  %v2237 = vrot.slane %v1585, 3
  %v2238 = vsel %vm1709, %v2235, %v2237
  %v2239 = vrot.slane %v1586, 3
  %v2240 = vsel %vm1709, %v2237, %v2239
  %v2241 = vrot.slane %v1587, 3
  %v2242 = vsel %vm1709, %v2239, %v2241
  %2243 = vrot.lane.b32.xlu0 %v2226, 112
  %v2244 = vpop.permute.xlu0 %2243
  %2245 = vrot.lane.b32.xlu0 %v2228, 112
  %v2246 = vpop.permute.xlu0 %2245
  %2247 = vrot.lane.b32.xlu0 %v2230, 112
  %v2248 = vpop.permute.xlu0 %2247
  %2249 = vrot.lane.b32.xlu0 %v2232, 112
  %v2250 = vpop.permute.xlu0 %2249
  %2251 = vrot.lane.b32.xlu0 %v2234, 112
  %v2252 = vpop.permute.xlu0 %2251
  %2253 = vrot.lane.b32.xlu0 %v2236, 112
  %v2254 = vpop.permute.xlu0 %2253
  %2255 = vrot.lane.b32.xlu0 %v2238, 112
  %v2256 = vpop.permute.xlu0 %2255
  %2257 = vrot.lane.b32.xlu0 %v2240, 112
  %v2258 = vpop.permute.xlu0 %2257
  %2259 = vrot.lane.b32.xlu0 %v2242, 112
  %v2260 = vpop.permute.xlu0 %2259
  %v2270 = vrot.slane %v1590, 5
  %v2271 = vrot.slane %v1591, 5
  %v2272 = vsel %vm1870, %v2270, %v2271
  %v2273 = vrot.slane %v1592, 5
  %v2274 = vsel %vm1870, %v2271, %v2273
  %v2275 = vrot.slane %v1593, 5
  %v2276 = vsel %vm1870, %v2273, %v2275
  %v2277 = vrot.slane %v1594, 5
  %v2278 = vsel %vm1870, %v2275, %v2277
  %v2279 = vrot.slane %v1595, 5
  %v2280 = vsel %vm1870, %v2277, %v2279
  %v2281 = vrot.slane %v1596, 5
  %v2282 = vsel %vm1870, %v2279, %v2281
  %v2283 = vrot.slane %v1597, 5
  %v2284 = vsel %vm1870, %v2281, %v2283
  %v2285 = vrot.slane %v1598, 5
  %v2286 = vsel %vm1870, %v2283, %v2285
  %v2287 = vrot.slane %v1599, 5
  %v2288 = vsel %vm1870, %v2285, %v2287
  %2289 = vrot.lane.b32.xlu0 %v2272, 120
  %v2290 = vpop.permute.xlu0 %2289
  %2291 = vrot.lane.b32.xlu0 %v2274, 120
  %v2292 = vpop.permute.xlu0 %2291
  %2293 = vrot.lane.b32.xlu0 %v2276, 120
  %v2294 = vpop.permute.xlu0 %2293
  %2295 = vrot.lane.b32.xlu0 %v2278, 120
  %v2296 = vpop.permute.xlu0 %2295
  %2297 = vrot.lane.b32.xlu0 %v2280, 120
  %v2298 = vpop.permute.xlu0 %2297
  %2299 = vrot.lane.b32.xlu0 %v2282, 120
  %v2300 = vpop.permute.xlu0 %2299
  %2301 = vrot.lane.b32.xlu0 %v2284, 120
  %v2302 = vpop.permute.xlu0 %2301
  %2303 = vrot.lane.b32.xlu0 %v2286, 120
  %v2304 = vpop.permute.xlu0 %2303
  %2305 = vrot.lane.b32.xlu0 %v2288, 120
  %v2306 = vpop.permute.xlu0 %2305
  %v2316 = vsel %vm561, %v1554, %v1628
  %v2317 = vsel %vm561, %v1555, %v1630
  %v2318 = vsel %vm561, %v1556, %v1632
  %v2319 = vsel %vm561, %v1557, %v1634
  %v2320 = vsel %vm561, %v1558, %v1636
  %v2321 = vsel %vm561, %v1559, %v1638
  %v2322 = vsel %vm561, %v1560, %v1640
  %v2323 = vsel %vm561, %v1561, %v1642
  %v2324 = vsel %vm561, %v1562, %v1644
  %vm2325 = vcmask 130048
  %v2326 = vsel %vm2325, %v2316, %v1682
  %v2327 = vsel %vm2325, %v2317, %v1684
  %v2328 = vsel %vm2325, %v2318, %v1686
  %v2329 = vsel %vm2325, %v2319, %v1688
  %v2330 = vsel %vm2325, %v2320, %v1690
  %v2331 = vsel %vm2325, %v2321, %v1692
  %v2332 = vsel %vm2325, %v2322, %v1694
  %v2333 = vsel %vm2325, %v2323, %v1696
  %v2334 = vsel %vm2325, %v2324, %v1698
  %vm2335 = vcmask 195584
  %v2336 = vsel %vm2335, %v2326, %v1730
  %v2337 = vsel %vm2335, %v2327, %v1732
  %v2338 = vsel %vm2335, %v2328, %v1734
  %v2339 = vsel %vm2335, %v2329, %v1736
  %v2340 = vsel %vm2335, %v2330, %v1738
  %v2341 = vsel %vm2335, %v2331, %v1740
  %v2342 = vsel %vm2335, %v2332, %v1742
  %v2343 = vsel %vm2335, %v2333, %v1744
  %v2344 = vsel %vm2335, %v2334, %v1746
  %vm2345 = vcmask 261120
  %v2346 = vsel %vm2345, %v2336, %v1787
  %v2347 = vsel %vm2345, %v2337, %v1789
  %v2348 = vsel %vm2345, %v2338, %v1791
  %v2349 = vsel %vm2345, %v2339, %v1793
  %v2350 = vsel %vm2345, %v2340, %v1795
  %v2351 = vsel %vm2345, %v2341, %v1797
  %v2352 = vsel %vm2345, %v2342, %v1799
  %v2353 = vsel %vm2345, %v2343, %v1801
  %v2354 = vsel %vm2345, %v2344, %v1803
  %vm2355 = vcmask 326656
  %v2356 = vsel %vm2355, %v2346, %v1844
  %v2357 = vsel %vm2355, %v2347, %v1846
  %v2358 = vsel %vm2355, %v2348, %v1848
  %v2359 = vsel %vm2355, %v2349, %v1850
  %v2360 = vsel %vm2355, %v2350, %v1852
  %v2361 = vsel %vm2355, %v2351, %v1854
  %v2362 = vsel %vm2355, %v2352, %v1856
  %v2363 = vsel %vm2355, %v2353, %v1858
  %v2364 = vsel %vm2355, %v2354, %v1860
  %vm2365 = vcmask 392192
  %v2366 = vsel %vm2365, %v2356, %v1891
  %v2367 = vsel %vm2365, %v2357, %v1893
  %v2368 = vsel %vm2365, %v2358, %v1895
  %v2369 = vsel %vm2365, %v2359, %v1897
  %v2370 = vsel %vm2365, %v2360, %v1899
  %v2371 = vsel %vm2365, %v2361, %v1901
  %v2372 = vsel %vm2365, %v2362, %v1903
  %v2373 = vsel %vm2365, %v2363, %v1905
  %v2374 = vsel %vm2365, %v2364, %v1907
  %vm2375 = vcmask 457728
  %v2376 = vsel %vm2375, %v2366, %v1938
  %v2377 = vsel %vm2375, %v2367, %v1940
  %v2378 = vsel %vm2375, %v2368, %v1942
  %v2379 = vsel %vm2375, %v2369, %v1944
  %v2380 = vsel %vm2375, %v2370, %v1946
  %v2381 = vsel %vm2375, %v2371, %v1948
  %v2382 = vsel %vm2375, %v2372, %v1950
  %v2383 = vsel %vm2375, %v2373, %v1952
  %v2384 = vsel %vm2375, %v2374, %v1954
  %v2385 = vsel %vm253, %v2376, %v1986
  %v2386 = vsel %vm253, %v2377, %v1988
  %v2387 = vsel %vm253, %v2378, %v1990
  %v2388 = vsel %vm253, %v2379, %v1992
  %v2389 = vsel %vm253, %v2380, %v1994
  %v2390 = vsel %vm253, %v2381, %v1996
  %v2391 = vsel %vm253, %v2382, %v1998
  %v2392 = vsel %vm253, %v2383, %v2000
  %v2393 = vsel %vm253, %v2384, %v2002
  %vm2394 = vcmask 588800
  %v2395 = vsel %vm2394, %v2385, %v2014
  %v2396 = vsel %vm2394, %v2386, %v2016
  %v2397 = vsel %vm2394, %v2387, %v2018
  %v2398 = vsel %vm2394, %v2388, %v2020
  %v2399 = vsel %vm2394, %v2389, %v2022
  %v2400 = vsel %vm2394, %v2390, %v2024
  %v2401 = vsel %vm2394, %v2391, %v2026
  %v2402 = vsel %vm2394, %v2392, %v2028
  %v2403 = vsel %vm2394, %v2393, %v2030
  %vm2404 = vcmask 654336
  %v2405 = vsel %vm2404, %v2395, %v2060
  %v2406 = vsel %vm2404, %v2396, %v2062
  %v2407 = vsel %vm2404, %v2397, %v2064
  %v2408 = vsel %vm2404, %v2398, %v2066
  %v2409 = vsel %vm2404, %v2399, %v2068
  %v2410 = vsel %vm2404, %v2400, %v2070
  %v2411 = vsel %vm2404, %v2401, %v2072
  %v2412 = vsel %vm2404, %v2402, %v2074
  %v2413 = vsel %vm2404, %v2403, %v2076
  %vm2414 = vcmask 719872
  %v2415 = vsel %vm2414, %v2405, %v2104
  %v2416 = vsel %vm2414, %v2406, %v2106
  %v2417 = vsel %vm2414, %v2407, %v2108
  %v2418 = vsel %vm2414, %v2408, %v2110
  %v2419 = vsel %vm2414, %v2409, %v2112
  %v2420 = vsel %vm2414, %v2410, %v2114
  %v2421 = vsel %vm2414, %v2411, %v2116
  %v2422 = vsel %vm2414, %v2412, %v2118
  %v2423 = vsel %vm2414, %v2413, %v2120
  %vm2424 = vcmask 785408
  %v2425 = vsel %vm2424, %v2415, %v2149
  %v2426 = vsel %vm2424, %v2416, %v2151
  %v2427 = vsel %vm2424, %v2417, %v2153
  %v2428 = vsel %vm2424, %v2418, %v2155
  %v2429 = vsel %vm2424, %v2419, %v2157
  %v2430 = vsel %vm2424, %v2420, %v2159
  %v2431 = vsel %vm2424, %v2421, %v2161
  %v2432 = vsel %vm2424, %v2422, %v2163
  %v2433 = vsel %vm2424, %v2423, %v2165
  %vm2434 = vcmask 850944
  %v2435 = vsel %vm2434, %v2425, %v2197
  %v2436 = vsel %vm2434, %v2426, %v2199
  %v2437 = vsel %vm2434, %v2427, %v2201
  %v2438 = vsel %vm2434, %v2428, %v2203
  %v2439 = vsel %vm2434, %v2429, %v2205
  %v2440 = vsel %vm2434, %v2430, %v2207
  %v2441 = vsel %vm2434, %v2431, %v2209
  %v2442 = vsel %vm2434, %v2432, %v2211
  %v2443 = vsel %vm2434, %v2433, %v2213
  %vm2444 = vcmask 916480
  %v2445 = vsel %vm2444, %v2435, %v2244
  %v2446 = vsel %vm2444, %v2436, %v2246
  %v2447 = vsel %vm2444, %v2437, %v2248
  %v2448 = vsel %vm2444, %v2438, %v2250
  %v2449 = vsel %vm2444, %v2439, %v2252
  %v2450 = vsel %vm2444, %v2440, %v2254
  %v2451 = vsel %vm2444, %v2441, %v2256
  %v2452 = vsel %vm2444, %v2442, %v2258
  %v2453 = vsel %vm2444, %v2443, %v2260
  %vm2454 = vcmask 982016
  %v2455 = vsel %vm2454, %v2445, %v2290
  %v2456 = vsel %vm2454, %v2446, %v2292
  %v2457 = vsel %vm2454, %v2447, %v2294
  %v2458 = vsel %vm2454, %v2448, %v2296
  %v2459 = vsel %vm2454, %v2449, %v2298
  %v2460 = vsel %vm2454, %v2450, %v2300
  %v2461 = vsel %vm2454, %v2451, %v2302
  %v2462 = vsel %vm2454, %v2452, %v2304
  %v2463 = vsel %vm2454, %v2453, %v2306
  %v2464 = vpack.c.bf16 %v2456, %v2455
  %v2465 = vpack.c.bf16 %v2458, %v2457
  %v2466 = vpack.c.bf16 %v2460, %v2459
  %v2467 = vpack.c.bf16 %v2462, %v2461
  %v2468 = vpack.c.bf16 %v2463, %v2463
  %v2469 = vld [vmem:[%s6] sm:$0xf]
  %v2470 = vld [vmem:[%s6 + $0x4] sm:$0xf]
  %v2471 = vld [vmem:[%s6 + $0x8] sm:$0xf]
  %v2472 = vld [vmem:[%s6 + $0xc] sm:$0xf]
  %v2473 = vld [vmem:[%s6 + $0x10] sm:$0xf]
  %v2474 = vld [vmem:[%s6 + $0x14] sm:$0xf]
  %v2475 = vld [vmem:[%s6 + $0x18] sm:$0xf]
  %v2476 = vld [vmem:[%s6 + $0x1c] sm:$0xf]
  %v2477 = vld [vmem:[%s6 + $0x20] sm:$0xf]
  %v2478 = vld [vmem:[%s6 + $0x24] sm:$0xf]
  %v2479 = vld [vmem:[%s6 + $0x28] sm:$0xf]
  %v2480 = vld [vmem:[%s6 + $0x2c] sm:$0xf]
  %v2481 = vld [vmem:[%s6 + $0x30] sm:$0xf]
  %v2482 = vld [vmem:[%s6 + $0x34] sm:$0xf]
  %v2483 = vld [vmem:[%s6 + $0x38] sm:$0xf]
  %v2484 = vld [vmem:[%s6 + $0x3c] sm:$0xf]
  %v2485 = vld [vmem:[%s7] sm:$0x1]
  %v2487 = vlaneseq
  %v2488 = vshrl.u32 %v2487, 7
  %v2489 = vsub.s32 0, %v2488
  %v2490 = vrot.slane %v2485, %v2489
  %v2508 = vunpack.c.l.b16 %v2469
  %v2509 = vunpack.c.l.b16 %v2470
  %v2510 = vunpack.c.l.b16 %v2471
  %v2511 = vunpack.c.l.b16 %v2472
  %v2512 = vunpack.c.l.b16 %v2473
  %v2513 = vunpack.c.l.b16 %v2474
  %v2514 = vunpack.c.l.b16 %v2475
  %v2515 = vunpack.c.l.b16 %v2476
  %v2516 = vunpack.c.l.b16 %v2477
  %v2517 = vunpack.c.l.b16 %v2478
  %v2518 = vunpack.c.l.b16 %v2479
  %v2519 = vunpack.c.l.b16 %v2480
  %v2520 = vunpack.c.l.b16 %v2481
  %v2521 = vunpack.c.l.b16 %v2482
  %v2522 = vunpack.c.l.b16 %v2483
  %v2523 = vunpack.c.l.b16 %v2484
  %v2524 = vpack.c.b16 %v2509, %v2508
  %v2525 = vpack.c.b16 %v2511, %v2510
  %v2526 = vpack.c.b16 %v2513, %v2512
  %v2527 = vpack.c.b16 %v2515, %v2514
  %v2528 = vpack.c.b16 %v2517, %v2516
  %v2529 = vpack.c.b16 %v2519, %v2518
  %v2530 = vpack.c.b16 %v2521, %v2520
  %v2531 = vpack.c.b16 %v2523, %v2522
  %2540 = vmatprep.subr.bf16.mxu0 0
  %2541 = vmatpush1.bf16.msra.mxu0 %v2524
  %2542 = vmatprep.subr.bf16.mxu0 0
  %2543 = vmatpush1.bf16.msra.mxu0 %v2525
  %2544 = vmatprep.subr.bf16.mxu0 0
  %2545 = vmatpush1.bf16.msra.mxu0 %v2526
  %2546 = vmatprep.subr.bf16.mxu0 0
  %2547 = vmatpush1.bf16.msra.mxu0 %v2527
  %2548 = vmatprep.subr.bf16.mxu0 0
  %2549 = vmatpush1.bf16.msra.mxu0 %v2528
  %2550 = vmatprep.subr.bf16.mxu0 0
  %2551 = vmatpush1.bf16.msra.mxu0 %v2529
  %2552 = vmatprep.subr.bf16.mxu0 0
  %2553 = vmatpush1.bf16.msra.mxu0 %v2530
  %2554 = vmatprep.subr.bf16.mxu0 0
  %2555 = vmatpush1.bf16.msra.mxu0 %v2531
  %2556 = vmatprep.subr.bf16.mxu0 0
  %2557 = vmatpush1.bf16.msra.mxu0 0
  %2558 = vmatprep.subr.bf16.mxu0 0
  %2559 = vmatpush1.bf16.msra.mxu0 0
  %2560 = vmatprep.subr.bf16.mxu0 0
  %2561 = vmatpush1.bf16.msra.mxu0 0
  %2562 = vmatprep.subr.bf16.mxu0 0
  %2563 = vmatpush1.bf16.msra.mxu0 0
  %2564 = vmatprep.subr.bf16.mxu0 0
  %2565 = vmatpush1.bf16.msra.mxu0 0
  %2566 = vmatprep.subr.bf16.mxu0 0
  %2567 = vmatpush1.bf16.msra.mxu0 0
  %2568 = vmatprep.subr.bf16.mxu0 0
  %2569 = vmatpush1.bf16.msra.mxu0 0
  %2570 = vmatprep.subr.bf16.mxu0 0
  %2571 = vmatpush1.bf16.msra.mxu0 0
  %2572 = vmatprep.mubr.bf16.mxu0 0
  %2573 = vmatmul.mubr.bf16.gmra.mrb[0].mxu0 %v2464
  %v2574 = vpop.f32.mrb[0].mxu0
  %v2575 = vadd.f32 %v2490, %v2574
  %v2576 = vpop.f32.mrb[0].mxu0
  %v2577 = vpop.f32.mrb[0].mxu0
  %v2578 = vadd.f32 %v2490, %v2577
  %v2579 = vpop.f32.mrb[0].mxu0
  %2580 = vmatprep.mubr.bf16.mxu0 0
  %2581 = vmatmul.mubr.bf16.gmra.mrb[0].mxu0 %v2465
  %v2582 = vpop.f32.mrb[0].mxu0
  %v2583 = vadd.f32 %v2490, %v2582
  %v2584 = vpop.f32.mrb[0].mxu0
  %v2585 = vpop.f32.mrb[0].mxu0
  %v2586 = vadd.f32 %v2490, %v2585
  %v2587 = vpop.f32.mrb[0].mxu0
  %2588 = vmatprep.mubr.bf16.mxu0 0
  %2589 = vmatmul.mubr.bf16.gmra.mrb[0].mxu0 %v2466
  %v2590 = vpop.f32.mrb[0].mxu0
  %v2591 = vadd.f32 %v2490, %v2590
  %v2592 = vpop.f32.mrb[0].mxu0
  %v2593 = vpop.f32.mrb[0].mxu0
  %v2594 = vadd.f32 %v2490, %v2593
  %v2595 = vpop.f32.mrb[0].mxu0
  %2596 = vmatprep.mubr.bf16.mxu0 0
  %2597 = vmatmul.mubr.bf16.gmra.mrb[0].mxu0 %v2467
  %v2598 = vpop.f32.mrb[0].mxu0
  %v2599 = vadd.f32 %v2490, %v2598
  %v2600 = vpop.f32.mrb[0].mxu0
  %v2601 = vpop.f32.mrb[0].mxu0
  %v2602 = vadd.f32 %v2490, %v2601
  %v2603 = vpop.f32.mrb[0].mxu0
  %2604 = vmatprep.mubr.bf16.mxu0 0
  %2605 = vmatmul.mubr.bf16.gmra.mrb[0].mxu0 %v2468
  %v2606 = vpop.f32.mrb[0].mxu0
  %v2607 = vadd.f32 %v2490, %v2606
  %v2608 = vpop.f32.mrb[0].mxu0
  %v2609 = vpop.f32.mrb[0].mxu0
  %v2610 = vpop.f32.mrb[0].mxu0
  %2611 = vdwg.mxu0
  %2612 = vst.msk [vmem:[%s12] sm:$0xff] %vm2325, %v2575
  %2613 = vst.msk [vmem:[%s12 + $0x8] sm:$0xff] %vm2325, %v2578
  %2614 = vst.msk [vmem:[%s12 + $0x10] sm:$0xff] %vm2325, %v2583
  %2615 = vst.msk [vmem:[%s12 + $0x18] sm:$0xff] %vm2325, %v2586
  %2616 = vst.msk [vmem:[%s12 + $0x20] sm:$0xff] %vm2325, %v2591
  %2617 = vst.msk [vmem:[%s12 + $0x28] sm:$0xff] %vm2325, %v2594
  %2618 = vst.msk [vmem:[%s12 + $0x30] sm:$0xff] %vm2325, %v2599
  %2619 = vst.msk [vmem:[%s12 + $0x38] sm:$0xff] %vm2325, %v2602
  %vm2620 = vcmask 128000
  %2621 = vst.msk [vmem:[%s12 + $0x40] sm:$0x3f] %vm2620, %v2607
  %v2622 = vld [vmem:[%s10] sm:$0xff]
  %v2623 = vld [vmem:[%s10 + $0x8] sm:$0xff]
  %v2624 = vld [vmem:[%s10 + $0x10] sm:$0xff]
  %v2625 = vld [vmem:[%s10 + $0x18] sm:$0xff]
  %v2626 = vld [vmem:[%s10 + $0x20] sm:$0xff]
  %v2627 = vld [vmem:[%s10 + $0x28] sm:$0xff]
  %v2628 = vld [vmem:[%s10 + $0x30] sm:$0xff]
  %v2629 = vld [vmem:[%s10 + $0x38] sm:$0xff]
  %v2630 = vld [vmem:[%s10 + $0x40] sm:$0x3f]
  %2632 = vset.pattern.permute.xlu0 0
  %2633 = vperm.xlu0 %2632, %v2622
  %v2634 = vpop.permute.xlu0 %2633
  %2637 = vset.pattern.permute.xlu0 0
  %2638 = vperm.xlu0 %2637, %v2623
  %v2639 = vpop.permute.xlu0 %2638
  %2642 = vset.pattern.permute.xlu0 0
  %2643 = vperm.xlu0 %2642, %v2624
  %v2644 = vpop.permute.xlu0 %2643
  %2647 = vset.pattern.permute.xlu0 0
  %2648 = vperm.xlu0 %2647, %v2625
  %v2649 = vpop.permute.xlu0 %2648
  %2652 = vset.pattern.permute.xlu0 0
  %2653 = vperm.xlu0 %2652, %v2626
  %v2654 = vpop.permute.xlu0 %2653
  %2657 = vset.pattern.permute.xlu0 0
  %2658 = vperm.xlu0 %2657, %v2627
  %v2659 = vpop.permute.xlu0 %2658
  %2662 = vset.pattern.permute.xlu0 0
  %2663 = vperm.xlu0 %2662, %v2628
  %v2664 = vpop.permute.xlu0 %2663
  %2667 = vset.pattern.permute.xlu0 0
  %2668 = vperm.xlu0 %2667, %v2629
  %v2669 = vpop.permute.xlu0 %2668
  %2672 = vset.pattern.permute.xlu0 0
  %2673 = vperm.xlu0 %2672, %v2630
  %v2674 = vpop.permute.xlu0 %2673
  %v2676 = vmul.f32 %v2575, %v2634
  %v2677 = vmul.f32 %v2578, %v2639
  %v2678 = vmul.f32 %v2583, %v2644
  %v2679 = vmul.f32 %v2586, %v2649
  %v2680 = vmul.f32 %v2591, %v2654
  %v2681 = vmul.f32 %v2594, %v2659
  %v2682 = vmul.f32 %v2599, %v2664
  %v2683 = vmul.f32 %v2602, %v2669
  %v2684 = vmul.f32 %v2607, %v2674
  %v2685 = vsel %vm2325, %v2676, 0.0
  %v2686 = vsel %vm2325, %v2677, 0.0
  %v2687 = vadd.f32 %v2685, %v2686
  %v2688 = vsel %vm2325, %v2678, 0.0
  %v2689 = vadd.f32 %v2687, %v2688
  %v2690 = vsel %vm2325, %v2679, 0.0
  %v2691 = vadd.f32 %v2689, %v2690
  %v2692 = vsel %vm2325, %v2680, 0.0
  %v2693 = vadd.f32 %v2691, %v2692
  %v2694 = vsel %vm2325, %v2681, 0.0
  %v2695 = vadd.f32 %v2693, %v2694
  %v2696 = vsel %vm2325, %v2682, 0.0
  %v2697 = vadd.f32 %v2695, %v2696
  %v2698 = vsel %vm2325, %v2683, 0.0
  %v2699 = vadd.f32 %v2697, %v2698
  %v2700 = vsel %vm2620, %v2684, 0.0
  %v2701 = vadd.f32 %v2699, %v2700
  %v2702 = vrot.slane %v2701, 4
  %v2703 = vadd.f32 %v2701, %v2702
  %v2704 = vrot.slane %v2703, 2
  %v2705 = vadd.f32 %v2703, %v2704
  %v2706 = vrot.slane %v2705, 1
  %v2707 = vadd.f32 %v2705, %v2706
  %v2708 = vmul.f32 %v2707, 0.02
  %v2709 = vsub.f32 %v2575, %v2708
  %v2710 = vsub.f32 %v2578, %v2708
  %v2711 = vsub.f32 %v2583, %v2708
  %v2712 = vsub.f32 %v2586, %v2708
  %v2713 = vsub.f32 %v2591, %v2708
  %v2714 = vsub.f32 %v2594, %v2708
  %v2715 = vsub.f32 %v2599, %v2708
  %v2716 = vsub.f32 %v2602, %v2708
  %v2717 = vsub.f32 %v2607, %v2708
  %v2718 = vmul.f32 %v2709, %v2709
  %v2719 = vmul.f32 %v2710, %v2710
  %v2720 = vmul.f32 %v2711, %v2711
  %v2721 = vmul.f32 %v2712, %v2712
  %v2722 = vmul.f32 %v2713, %v2713
  %v2723 = vmul.f32 %v2714, %v2714
  %v2724 = vmul.f32 %v2715, %v2715
  %v2725 = vmul.f32 %v2716, %v2716
  %v2726 = vmul.f32 %v2717, %v2717
  %v2727 = vmul.f32 %v2718, %v2634
  %v2728 = vmul.f32 %v2719, %v2639
  %v2729 = vmul.f32 %v2720, %v2644
  %v2730 = vmul.f32 %v2721, %v2649
  %v2731 = vmul.f32 %v2722, %v2654
  %v2732 = vmul.f32 %v2723, %v2659
  %v2733 = vmul.f32 %v2724, %v2664
  %v2734 = vmul.f32 %v2725, %v2669
  %v2735 = vmul.f32 %v2726, %v2674
  %v2736 = vsel %vm2325, %v2727, 0.0
  %v2737 = vsel %vm2325, %v2728, 0.0
  %v2738 = vadd.f32 %v2736, %v2737
  %v2739 = vsel %vm2325, %v2729, 0.0
  %v2740 = vadd.f32 %v2738, %v2739
  %v2741 = vsel %vm2325, %v2730, 0.0
  %v2742 = vadd.f32 %v2740, %v2741
  %v2743 = vsel %vm2325, %v2731, 0.0
  %v2744 = vadd.f32 %v2742, %v2743
  %v2745 = vsel %vm2325, %v2732, 0.0
  %v2746 = vadd.f32 %v2744, %v2745
  %v2747 = vsel %vm2325, %v2733, 0.0
  %v2748 = vadd.f32 %v2746, %v2747
  %v2749 = vsel %vm2325, %v2734, 0.0
  %v2750 = vadd.f32 %v2748, %v2749
  %v2751 = vsel %vm2620, %v2735, 0.0
  %v2752 = vadd.f32 %v2750, %v2751
  %v2753 = vrot.slane %v2752, 4
  %v2754 = vadd.f32 %v2752, %v2753
  %v2755 = vrot.slane %v2754, 2
  %v2756 = vadd.f32 %v2754, %v2755
  %v2757 = vrot.slane %v2756, 1
  %v2758 = vadd.f32 %v2756, %v2757
  %v2759 = vmul.f32 %v2758, 0.02
  %v2760 = vadd.f32 %v2759, 1e-05
  %v2761 = vrsqrt.pop %v2760
  %v2762 = vld [vmem:[%s8] sm:$0x1]
  %v2763 = vmul.f32 %v2761, %v2762
  %v2764 = vlaneseq
  %v2765 = vshrl.u32 %v2764, 7
  %v2766 = vsub.s32 0, %v2765
  %v2767 = vrot.slane %v2763, %v2766
  %v2768 = vmul.f32 %v2709, %v2767
  %v2769 = vmul.f32 %v2710, %v2767
  %v2770 = vmul.f32 %v2711, %v2767
  %v2771 = vmul.f32 %v2712, %v2767
  %v2772 = vmul.f32 %v2713, %v2767
  %v2773 = vmul.f32 %v2714, %v2767
  %v2774 = vmul.f32 %v2715, %v2767
  %v2775 = vmul.f32 %v2716, %v2767
  %v2776 = vmul.f32 %v2717, %v2767
  %v2777 = vld [vmem:[%s9] sm:$0x1]
  %v2779 = vlaneseq
  %v2780 = vshrl.u32 %v2779, 7
  %v2781 = vsub.s32 0, %v2780
  %v2782 = vrot.slane %v2777, %v2781
  %v2784 = vadd.f32 %v2768, %v2782
  %v2785 = vadd.f32 %v2769, %v2782
  %v2786 = vadd.f32 %v2770, %v2782
  %v2787 = vadd.f32 %v2771, %v2782
  %v2788 = vadd.f32 %v2772, %v2782
  %v2789 = vadd.f32 %v2773, %v2782
  %v2790 = vadd.f32 %v2774, %v2782
  %v2791 = vadd.f32 %v2775, %v2782
  %v2792 = vadd.f32 %v2776, %v2782
  %vm2793 = vcmp.gt.f32.partialorder %v2784, 0.0
  %vm2794 = vcmp.gt.f32.partialorder %v2785, 0.0
  %vm2795 = vcmp.gt.f32.partialorder %v2786, 0.0
  %vm2796 = vcmp.gt.f32.partialorder %v2787, 0.0
  %vm2797 = vcmp.gt.f32.partialorder %v2788, 0.0
  %vm2798 = vcmp.gt.f32.partialorder %v2789, 0.0
  %vm2799 = vcmp.gt.f32.partialorder %v2790, 0.0
  %vm2800 = vcmp.gt.f32.partialorder %v2791, 0.0
  %vm2801 = vcmp.gt.f32.partialorder %v2792, 0.0
  %v2802 = vmul.f32 %v2784, 0.2
  %v2803 = vmul.f32 %v2785, 0.2
  %v2804 = vmul.f32 %v2786, 0.2
  %v2805 = vmul.f32 %v2787, 0.2
  %v2806 = vmul.f32 %v2788, 0.2
  %v2807 = vmul.f32 %v2789, 0.2
  %v2808 = vmul.f32 %v2790, 0.2
  %v2809 = vmul.f32 %v2791, 0.2
  %v2810 = vmul.f32 %v2792, 0.2
  %v2811 = vsel %vm2793, %v2784, %v2802
  %v2812 = vsel %vm2794, %v2785, %v2803
  %v2813 = vsel %vm2795, %v2786, %v2804
  %v2814 = vsel %vm2796, %v2787, %v2805
  %v2815 = vsel %vm2797, %v2788, %v2806
  %v2816 = vsel %vm2798, %v2789, %v2807
  %v2817 = vsel %vm2799, %v2790, %v2808
  %v2818 = vsel %vm2800, %v2791, %v2809
  %v2819 = vsel %vm2801, %v2792, %v2810
  %2820 = vst.msk [vmem:[%s13] sm:$0xff] %vm2325, %v2811
  %2821 = vst.msk [vmem:[%s13 + $0x8] sm:$0xff] %vm2325, %v2812
  %2822 = vst.msk [vmem:[%s13 + $0x10] sm:$0xff] %vm2325, %v2813
  %2823 = vst.msk [vmem:[%s13 + $0x18] sm:$0xff] %vm2325, %v2814
  %2824 = vst.msk [vmem:[%s13 + $0x20] sm:$0xff] %vm2325, %v2815
  %2825 = vst.msk [vmem:[%s13 + $0x28] sm:$0xff] %vm2325, %v2816
  %2826 = vst.msk [vmem:[%s13 + $0x30] sm:$0xff] %vm2325, %v2817
  %2827 = vst.msk [vmem:[%s13 + $0x38] sm:$0xff] %vm2325, %v2818
  %2828 = vst.msk [vmem:[%s13 + $0x40] sm:$0x3f] %vm2620, %v2819
  // Predicated region
  $region46: #{patch_discriminator_forward.1} parent=0 // pred_check
    _
  $region47: #{patch_discriminator_forward.1} parent=0 // pred_check_branch
    %2830 = sbr.rel (0) target = $region49
  $region48: #{patch_discriminator_forward.1} parent=0 // pred_region
    _
  $region49: #{patch_discriminator_forward.1} parent=0 // pred_fallthru
    _
  // Predicated region
  $region50: #{patch_discriminator_forward.1} parent=0 // pred_check
    _
  $region51: #{patch_discriminator_forward.1} parent=0 // pred_check_branch
    %2832 = sbr.rel (0) target = $region53
  $region52: #{patch_discriminator_forward.1} parent=0 // pred_region
    _
  $region53: #{patch_discriminator_forward.1} parent=0 // pred_fallthru
    _
  // Predicated region
  $region54: #{patch_discriminator_forward.1} parent=0 // pred_check
    _
  $region55: #{patch_discriminator_forward.1} parent=0 // pred_check_branch
    %2834 = sbr.rel (0) target = $region57
  $region56: #{patch_discriminator_forward.1} parent=0 // pred_region
    _
  $region57: #{patch_discriminator_forward.1} parent=0 // pred_fallthru
    _
  // Predicated region
  $region58: #{patch_discriminator_forward.1} parent=0 // pred_check
    _
  $region59: #{patch_discriminator_forward.1} parent=0 // pred_check_branch
    %2836 = sbr.rel (0) target = $region61
  $region60: #{patch_discriminator_forward.1} parent=0 // pred_region
    _
  $region61: #{patch_discriminator_forward.1} parent=0 // pred_fallthru
    _
  // Predicated region
  $region62: #{patch_discriminator_forward.1} parent=0 // pred_check
    _
  $region63: #{patch_discriminator_forward.1} parent=0 // pred_check_branch
    %2838 = sbr.rel (0) target = $region65
  $region64: #{patch_discriminator_forward.1} parent=0 // pred_region
    _
  $region65: #{patch_discriminator_forward.1} parent=0 // pred_fallthru
    _
  // Predicated region
  $region66: #{patch_discriminator_forward.1} parent=0 // pred_check
    _
  $region67: #{patch_discriminator_forward.1} parent=0 // pred_check_branch
    %2840 = sbr.rel (0) target = $region69
  $region68: #{patch_discriminator_forward.1} parent=0 // pred_region
    _
  $region69: #{patch_discriminator_forward.1} parent=0 // pred_fallthru
    _

</llo_original>
